<compile_context>
chip_gen: v6e
topology: v6e:2x2x1
jax: 0.10.0
libtpu: 0.0.40
codegen_flags: <defaults>
</compile_context>

<pallas_src>
import jax
import jax.numpy as jnp
from jax.experimental import pallas as pl
from jax.experimental.pallas import tpu as pltpu


def _pos_embed_kernel(col_ref, row_ref, sel_col_ref, sel_row_ref, out_ref):
    """Emits one batch element of the position embedding, lane-dense.

    col_ref:     (F, W)     col_embed.weight[:W].T  (channel-major)
    row_ref:     (F, H)     row_embed.weight[:H].T
    sel_col_ref: (W, H*W)   one-hot: sel_col[w, h*W + w] = 1
    sel_row_ref: (H, H*W)   one-hot: sel_row[h, h*W + w] = 1
    out_ref:     (2F, H*W)  batch dim squeezed away by the BlockSpec

    out[c,  h*W+w] = col_ref[c, w]   (col embedding broadcast over H)
    out[F+c,h*W+w] = row_ref[c, h]   (row embedding broadcast over W)
    """
    f = col_ref.shape[0]
    col_half = jnp.dot(
        col_ref[...], sel_col_ref[...],
        preferred_element_type=jnp.float32,
        precision=jax.lax.Precision.HIGHEST,
    )
    row_half = jnp.dot(
        row_ref[...], sel_row_ref[...],
        preferred_element_type=jnp.float32,
        precision=jax.lax.Precision.HIGHEST,
    )
    # Direct sub-range stores (F is a multiple of 8 -> clean sublane split).
    out_ref[:f, :] = col_half.astype(out_ref.dtype)
    out_ref[f:, :] = row_half.astype(out_ref.dtype)


def position_embedding_learned(x, col_weight, row_weight):
    """Forward pass of PositionEmbeddingLearned.

    x:          (B, C, H, W)  — only B, H, W are read (NCHW, like PyTorch).
    col_weight: (50, F) col_embed.weight
    row_weight: (50, F) row_embed.weight
    returns:    (B, 2F, H, W) float32
    """
    B = x.shape[0]
    H, W = x.shape[-2], x.shape[-1]
    F = col_weight.shape[1]
    HW = H * W

    if W > col_weight.shape[0] or H > row_weight.shape[0]:
        raise ValueError(
            f"H={H}, W={W} exceed the embedding table size "
            f"({row_weight.shape[0]}, {col_weight.shape[0]})"
        )

    # Embedding lookup of arange(W)/arange(H) is an identity gather of the
    # first W/H rows; transpose once here so the kernel gets channel-major
    # inputs and never touches the XLU.
    col_t = col_weight[:W].T.astype(jnp.float32)   # (F, W)
    row_t = row_weight[:H].T.astype(jnp.float32)   # (F, H)

    # Shape-only one-hot selection constants (layout plumbing, built once):
    #   sel_col[w, k] = 1  iff  k %  W == w
    #   sel_row[h, k] = 1  iff  k // W == h
    k = jnp.arange(HW, dtype=jnp.int32)
    sel_col = (k[None, :] % W == jnp.arange(W, dtype=jnp.int32)[:, None]
               ).astype(jnp.float32)               # (W, HW)
    sel_row = (k[None, :] // W == jnp.arange(H, dtype=jnp.int32)[:, None]
               ).astype(jnp.float32)               # (H, HW)

    out_flat = pl.pallas_call(
        _pos_embed_kernel,
        out_shape=jax.ShapeDtypeStruct((B, 2 * F, HW), col_weight.dtype),
        grid=(B,),
        in_specs=[
            pl.BlockSpec((F, W), lambda b: (0, 0)),
            pl.BlockSpec((F, H), lambda b: (0, 0)),
            pl.BlockSpec((W, HW), lambda b: (0, 0)),
            pl.BlockSpec((H, HW), lambda b: (0, 0)),
        ],
        # Batch dim squeezed (None) -> kernel sees a lane-dense (2F, HW) slab.
        out_specs=pl.BlockSpec((None, 2 * F, HW), lambda b: (b, 0, 0)),
        compiler_params=pltpu.CompilerParams(
            dimension_semantics=("parallel",)
        ),
        # TODO(synk): for production shapes (F=256, H*W large) tile the 2F
        # axis so each block fits v7x's 64 MiB VMEM with double buffering.
    )(col_t, row_t, sel_col, sel_row)

    # Free contiguous reshape back to NCHW.
    return out_flat.reshape(B, 2 * F, H, W)


def _reference(x, col_weight, row_weight):
    """Pure-JAX reference mirroring the PyTorch forward exactly."""
    B = x.shape[0]
    H, W = x.shape[-2], x.shape[-1]
    F = col_weight.shape[1]
    x_emb = col_weight[:W]                                   # (W, F)
    y_emb = row_weight[:H]                                   # (H, F)
    pos = jnp.concatenate(
        [
            jnp.broadcast_to(x_emb[None, :, :], (H, W, F)),  # repeat over H
            jnp.broadcast_to(y_emb[:, None, :], (H, W, F)),  # repeat over W
        ],
        axis=-1,
    )                                                        # (H, W, 2F)
    pos = jnp.transpose(pos, (2, 0, 1))                      # (2F, H, W)
    pos = jnp.broadcast_to(pos[None], (B, 2 * F, H, W))      # (B, 2F, H, W)
    return pos


if __name__ == "__main__":
    key = jax.random.PRNGKey(0)
    k_x, k_row, k_col = jax.random.split(key, 3)

    # Small shapes: batch=2, channels=4, spatial=16x16, num_pos_feats=32.
    B, C, H, W = 2, 4, 16, 16
    num_pos_feats = 32

    x = jax.random.normal(k_x, (B, C, H, W), dtype=jnp.float32)
    # nn.init.uniform_ -> U[0, 1)
    row_weight = jax.random.uniform(k_row, (50, num_pos_feats), dtype=jnp.float32)
    col_weight = jax.random.uniform(k_col, (50, num_pos_feats), dtype=jnp.float32)

    pos = position_embedding_learned(x, col_weight, row_weight)
    pos = jax.block_until_ready(pos)

    ref = _reference(x, col_weight, row_weight)
    assert pos.shape == (B, 2 * num_pos_feats, H, W), pos.shape
    assert pos.dtype == jnp.float32, pos.dtype
    assert jnp.allclose(pos, ref, rtol=1e-5, atol=1e-6), "mismatch vs reference"

    print("KERNEL_OK")
</pallas_src>

<mosaic_0001>
module attributes {stable_mosaic.version = 11 : i64} {
  func.func @_pos_embed_kernel(%arg0: i32, %arg1: memref<32x16xf32, #tpu.memory_space<vmem>>, %arg2: memref<32x16xf32, #tpu.memory_space<vmem>>, %arg3: memref<16x256xf32, #tpu.memory_space<vmem>>, %arg4: memref<16x256xf32, #tpu.memory_space<vmem>>, %arg5: memref<1x64x256xf32, #tpu.memory_space<vmem>>) attributes {dimension_semantics = [#tpu.dimension_semantics<parallel>], iteration_bounds = array<i64: 2>, scalar_prefetch = 0 : i64, scratch_operands = 0 : i64, tpu.core_type = #tpu.core_type<tc>, window_params = [{pipeline_mode = #tpu.pipeline_mode<synchronous>, transform_indices = @transform_0, window_bounds = array<i64: 32, 16>}, {pipeline_mode = #tpu.pipeline_mode<synchronous>, transform_indices = @transform_1, window_bounds = array<i64: 32, 16>}, {pipeline_mode = #tpu.pipeline_mode<synchronous>, transform_indices = @transform_2, window_bounds = array<i64: 16, 256>}, {pipeline_mode = #tpu.pipeline_mode<synchronous>, transform_indices = @transform_3, window_bounds = array<i64: 16, 256>}, {transform_indices = @transform_4, window_bounds = array<i64: 1, 64, 256>}]} {
    %c0 = arith.constant 0 : index
    %c0_0 = arith.constant 0 : index
    %0 = vector.load %arg1[%c0, %c0_0] : memref<32x16xf32, #tpu.memory_space<vmem>>, vector<32x16xf32>
    %c0_1 = arith.constant 0 : index
    %c0_2 = arith.constant 0 : index
    %1 = vector.load %arg3[%c0_1, %c0_2] : memref<16x256xf32, #tpu.memory_space<vmem>>, vector<16x256xf32>
    %cst = arith.constant dense<0.000000e+00> : vector<32x256xf32>
    %2 = tpu.matmul %0, %1, %cst {dimension_numbers = #tpu.dot_dimension_numbers<[1], [0], [0], [1], [0, 0, 1, 1], [], []>, precision = #tpu.contract_precision<fp32>} : vector<32x16xf32>, vector<16x256xf32>, vector<32x256xf32> -> vector<32x256xf32>
    %c0_3 = arith.constant 0 : index
    %c0_4 = arith.constant 0 : index
    %3 = vector.load %arg2[%c0_3, %c0_4] : memref<32x16xf32, #tpu.memory_space<vmem>>, vector<32x16xf32>
    %c0_5 = arith.constant 0 : index
    %c0_6 = arith.constant 0 : index
    %4 = vector.load %arg4[%c0_5, %c0_6] : memref<16x256xf32, #tpu.memory_space<vmem>>, vector<16x256xf32>
    %cst_7 = arith.constant dense<0.000000e+00> : vector<32x256xf32>
    %5 = tpu.matmul %3, %4, %cst_7 {dimension_numbers = #tpu.dot_dimension_numbers<[1], [0], [0], [1], [0, 0, 1, 1], [], []>, precision = #tpu.contract_precision<fp32>} : vector<32x16xf32>, vector<16x256xf32>, vector<32x256xf32> -> vector<32x256xf32>
    %c0_8 = arith.constant 0 : index
    %c0_9 = arith.constant 0 : index
    %c0_10 = arith.constant 0 : index
    %6 = vector.load %arg5[%c0_8, %c0_9, %c0_10] : memref<1x64x256xf32, #tpu.memory_space<vmem>>, vector<1x32x256xf32>
    %7 = vector.shape_cast %6 : vector<1x32x256xf32> to vector<32x256xf32>
    %8 = vector.shape_cast %2 : vector<32x256xf32> to vector<1x32x256xf32>
    tpu.vector_store %arg5[%c0_8, %c0_9, %c0_10], %8 {strides = array<i32>} : memref<1x64x256xf32, #tpu.memory_space<vmem>>, vector<1x32x256xf32>,
    %c0_11 = arith.constant 0 : index
    %c32 = arith.constant 32 : index
    %c0_12 = arith.constant 0 : index
    %9 = vector.load %arg5[%c0_11, %c32, %c0_12] : memref<1x64x256xf32, #tpu.memory_space<vmem>>, vector<1x32x256xf32>
    %10 = vector.shape_cast %9 : vector<1x32x256xf32> to vector<32x256xf32>
    %11 = vector.shape_cast %5 : vector<32x256xf32> to vector<1x32x256xf32>
    tpu.vector_store %arg5[%c0_11, %c32, %c0_12], %11 {strides = array<i32>} : memref<1x64x256xf32, #tpu.memory_space<vmem>>, vector<1x32x256xf32>,
    return
  }
  func.func @transform_0(%arg0: i32) -> (i32, i32) {
    %c0_i32 = arith.constant 0 : i32
    %c0_i32_0 = arith.constant 0 : i32
    %c0_i32_1 = arith.constant 0 : i32
    return %c0_i32, %c0_i32_0 : i32, i32
  }
  func.func @transform_1(%arg0: i32) -> (i32, i32) {
    %c0_i32 = arith.constant 0 : i32
    %c0_i32_0 = arith.constant 0 : i32
    %c0_i32_1 = arith.constant 0 : i32
    return %c0_i32, %c0_i32_0 : i32, i32
  }
  func.func @transform_2(%arg0: i32) -> (i32, i32) {
    %c0_i32 = arith.constant 0 : i32
    %c0_i32_0 = arith.constant 0 : i32
    %c0_i32_1 = arith.constant 0 : i32
    return %c0_i32, %c0_i32_0 : i32, i32
  }
  func.func @transform_3(%arg0: i32) -> (i32, i32) {
    %c0_i32 = arith.constant 0 : i32
    %c0_i32_0 = arith.constant 0 : i32
    %c0_i32_1 = arith.constant 0 : i32
    return %c0_i32, %c0_i32_0 : i32, i32
  }
  func.func @transform_4(%arg0: i32) -> (i32, i32, i32) {
    %c0_i32 = arith.constant 0 : i32
    %c0_i32_0 = arith.constant 0 : i32
    %c0_i32_1 = arith.constant 0 : i32
    return %arg0, %c0_i32, %c0_i32_0 : i32, i32, i32
  }
}

</mosaic_0001>

<llo_original>
// kernel: tpu_custom_call.1
$region0: #{tpu_custom_call.1}
  #allocation0 [shape = 'u32[]', space=smem, size = 0x4, offset = 0x4, fixed_abs, tag = 'smem constant byte address 0x4 - core index']
  #allocation1 [shape = 'u32[144,128]{1,0:T(1,128)}', space=vmem, size = 0x12000, scoped, tag = 'internal scratch']
  %s0 = inlined_call_operand.vmem [shape: f32[32,16], index: 0, kind: input, shape index: {}]
  %s1 = inlined_call_operand.vmem [shape: f32[32,16], index: 1, kind: input, shape index: {}]
  %s2 = inlined_call_operand.vmem [shape: f32[16,256], index: 2, kind: input, shape index: {}]
  %s3 = inlined_call_operand.vmem [shape: f32[16,256], index: 3, kind: input, shape index: {}]
  %s4 = inlined_call_operand.hbm [shape: f32[2,64,256], index: 4, kind: output, shape index: {}]
  %s5 = sld [smem:[#allocation0]]
  $region49: #{tpu_custom_call.1} parent=0
    _
  %s7 = ssub.s32 1, %s5
  %s8 = scalar_select 0, %s7, %s5
  $region1: #{tpu_custom_call.1} parent=0
    #allocation2 [shape = 'u8[131072]{0}', space=vmem, size = 0x20000, scoped, tag = 'output window, operand 0']
    #allocation3 [shape = 's32[2]{0}', space=sflag, size = 0x8, scoped, tag = 'scoped memory for tpu_custom_call.1']
    %9 = vsyncpa [#allocation3], 0
    %s10 = scalar_lea.sflag [#allocation3], 1
    %11 = vsyncpa %s10, 0
    loop: start=0, step=1, limit=4
    $region2: #{tpu_custom_call.1} parent=1 // loop_pre_header
      _
    $region3: #{tpu_custom_call.1} parent=1 // loop_header
      %s13 = sphi 0, %s17
      %p14 = scmp.ge.s32.totalorder %s13, 4
      %s21 = sphi 0, %s21
      %s23 = sphi 0, %s21
      %s24 = sphi 0, %s23
      %s38 = sphi 0, %s24
      %s42 = sphi 0, %s42
      %s44 = sphi 0, %s42
      %s45 = sphi 0, %s44
      %s59 = sphi 0, %s45
      %s63 = sphi 0, %s63
      %s65 = sphi 0, %s63
      %s66 = sphi 0, %s65
      %s80 = sphi 0, %s66
      %s84 = sphi 0, %s84
      %s86 = sphi 0, %s84
      %s87 = sphi 0, %s86
      %s101 = sphi 0, %s87
      %s107 = sphi 0, %s109
      %s110 = sphi 0, %s107
      %s111 = sphi 0, %s110
      %s127 = sphi 0, %s111
    $region4: #{tpu_custom_call.1} parent=1 // loop_header_branch
      %16 = sbr.rel (%p14) target = $region8
    $region5: #{tpu_custom_call.1} parent=1 // loop_body
      %s18 = ssub.s32 %s13, 1
      %s19 = ssub.s32 %s13, 2
      %s20 = sadd.s32 %s13, 1
      %s22 = sadd.s32 %s21, 1
      %p25 = scmp.eq.s32.totalorder %s13, 1
      %p26 = scmp.ne.s32.totalorder %s21, %s23
      %p27 = scmp.eq.s32.totalorder %s13, 0
      %p28 = por %p26, %p27
      %p29 = scmp.ne.s32.totalorder %s21, %s23
      %p30 = scmp.eq.s32.totalorder %s18, 1
      %p31 = por %p29, %p30
      %p32 = scmp.ne.s32.totalorder %s23, %s24
      %p33 = scmp.eq.s32.totalorder %s18, 0
      %p34 = por %p32, %p33
      %p35 = scmp.ne.s32.totalorder %s23, %s24
      %p36 = scmp.eq.s32.totalorder %s19, 1
      %p37 = por %p35, %p36
      %p39 = scmp.ne.s32.totalorder %s24, %s38
      %p40 = scmp.eq.s32.totalorder %s19, 0
      %p41 = por %p39, %p40
      %s43 = sadd.s32 %s42, 1
      %p46 = scmp.eq.s32.totalorder %s13, 1
      %p47 = scmp.ne.s32.totalorder %s42, %s44
      %p48 = scmp.eq.s32.totalorder %s13, 0
      %p49 = por %p47, %p48
      %p50 = scmp.ne.s32.totalorder %s42, %s44
      %p51 = scmp.eq.s32.totalorder %s18, 1
      %p52 = por %p50, %p51
      %p53 = scmp.ne.s32.totalorder %s44, %s45
      %p54 = scmp.eq.s32.totalorder %s18, 0
      %p55 = por %p53, %p54
      %p56 = scmp.ne.s32.totalorder %s44, %s45
      %p57 = scmp.eq.s32.totalorder %s19, 1
      %p58 = por %p56, %p57
      %p60 = scmp.ne.s32.totalorder %s45, %s59
      %p61 = scmp.eq.s32.totalorder %s19, 0
      %p62 = por %p60, %p61
      %s64 = sadd.s32 %s63, 1
      %p67 = scmp.eq.s32.totalorder %s13, 1
      %p68 = scmp.ne.s32.totalorder %s63, %s65
      %p69 = scmp.eq.s32.totalorder %s13, 0
      %p70 = por %p68, %p69
      %p71 = scmp.ne.s32.totalorder %s63, %s65
      %p72 = scmp.eq.s32.totalorder %s18, 1
      %p73 = por %p71, %p72
      %p74 = scmp.ne.s32.totalorder %s65, %s66
      %p75 = scmp.eq.s32.totalorder %s18, 0
      %p76 = por %p74, %p75
      %p77 = scmp.ne.s32.totalorder %s65, %s66
      %p78 = scmp.eq.s32.totalorder %s19, 1
      %p79 = por %p77, %p78
      %p81 = scmp.ne.s32.totalorder %s66, %s80
      %p82 = scmp.eq.s32.totalorder %s19, 0
      %p83 = por %p81, %p82
      %s85 = sadd.s32 %s84, 1
      %p88 = scmp.eq.s32.totalorder %s13, 1
      %p89 = scmp.ne.s32.totalorder %s84, %s86
      %p90 = scmp.eq.s32.totalorder %s13, 0
      %p91 = por %p89, %p90
      %p92 = scmp.ne.s32.totalorder %s84, %s86
      %p93 = scmp.eq.s32.totalorder %s18, 1
      %p94 = por %p92, %p93
      %p95 = scmp.ne.s32.totalorder %s86, %s87
      %p96 = scmp.eq.s32.totalorder %s18, 0
      %p97 = por %p95, %p96
      %p98 = scmp.ne.s32.totalorder %s86, %s87
      %p99 = scmp.eq.s32.totalorder %s19, 1
      %p100 = por %p98, %p99
      %p102 = scmp.ne.s32.totalorder %s87, %s101
      %p103 = scmp.eq.s32.totalorder %s19, 0
      %p104 = por %p102, %p103
      %s105 = ssub.s32 %s13, %s20
      %p106 = scmp.eq.s32.totalorder %s105, 0
      %s108 = sadd.s32 %s107, 1
      %s109 = scalar_select %p106, %s107, %s108
      %p112 = pneg %p106
      %p113 = scmp.eq.s32.totalorder %s13, 1
      %p114 = por %p112, %p113
      %p115 = scmp.ne.s32.totalorder %s107, %s110
      %p116 = scmp.eq.s32.totalorder %s13, 0
      %p117 = por %p115, %p116
      %p118 = scmp.ne.s32.totalorder %s107, %s110
      %p119 = scmp.eq.s32.totalorder %s18, 1
      %p120 = por %p118, %p119
      %p121 = scmp.ne.s32.totalorder %s110, %s111
      %p122 = scmp.eq.s32.totalorder %s18, 0
      %p123 = por %p121, %p122
      %p124 = scmp.ne.s32.totalorder %s110, %s111
      %p125 = scmp.eq.s32.totalorder %s19, 1
      %p126 = por %p124, %p125
      %p128 = scmp.ne.s32.totalorder %s111, %s127
      %p129 = scmp.eq.s32.totalorder %s19, 0
      %p130 = por %p128, %p129
      %p131 = scmp.le.s32.totalorder 1, %s13
      %p132 = scmp.lt.s32.totalorder %s13, 3
      %p133 = pnand %p131, %p132
      %p134 = pneg %p133
      // Predicated region
      $region9: #{tpu_custom_call.1} parent=5 // pred_check
        _
      $region10: #{tpu_custom_call.1} parent=5 // pred_check_branch
        %136 = sbr.rel (%p133) target = $region12
      $region11: #{tpu_custom_call.1} parent=5 // pred_region
        %s137 = ssub.s32 %s13, 1
        // Predicated region
        $region13: #{tpu_custom_call.1} parent=11 // pred_check
          %p138 = pneg %p34
        $region14: #{tpu_custom_call.1} parent=11 // pred_check_branch
          %140 = sbr.rel (%p138) target = $region16
        $region15: #{tpu_custom_call.1} parent=11 // pred_region
          _
        $region16: #{tpu_custom_call.1} parent=11 // pred_fallthru
          _
        // Predicated region
        $region17: #{tpu_custom_call.1} parent=11 // pred_check
          %p141 = pneg %p55
        $region18: #{tpu_custom_call.1} parent=11 // pred_check_branch
          %143 = sbr.rel (%p141) target = $region20
        $region19: #{tpu_custom_call.1} parent=11 // pred_region
          _
        $region20: #{tpu_custom_call.1} parent=11 // pred_fallthru
          _
        // Predicated region
        $region21: #{tpu_custom_call.1} parent=11 // pred_check
          %p144 = pneg %p76
        $region22: #{tpu_custom_call.1} parent=11 // pred_check_branch
          %146 = sbr.rel (%p144) target = $region24
        $region23: #{tpu_custom_call.1} parent=11 // pred_region
          _
        $region24: #{tpu_custom_call.1} parent=11 // pred_fallthru
          _
        // Predicated region
        $region25: #{tpu_custom_call.1} parent=11 // pred_check
          %p147 = pneg %p97
        $region26: #{tpu_custom_call.1} parent=11 // pred_check_branch
          %149 = sbr.rel (%p147) target = $region28
        $region27: #{tpu_custom_call.1} parent=11 // pred_region
          _
        $region28: #{tpu_custom_call.1} parent=11 // pred_fallthru
          _
      $region12: #{tpu_custom_call.1} parent=5 // pred_fallthru
        _
      %p150 = scmp.lt.s32.totalorder %s13, 2
      // Predicated region
      $region29: #{tpu_custom_call.1} parent=5 // pred_check
        %p151 = pneg %p150
      $region30: #{tpu_custom_call.1} parent=5 // pred_check_branch
        %153 = sbr.rel (%p151) target = $region32
      $region31: #{tpu_custom_call.1} parent=5 // pred_region
        _
      $region32: #{tpu_custom_call.1} parent=5 // pred_fallthru
        _
      %p154 = scmp.le.s32.totalorder 1, %s13
      %p155 = scmp.lt.s32.totalorder %s13, 3
      %p156 = pnand %p154, %p155
      %p157 = pneg %p156
      // Predicated region
      $region33: #{tpu_custom_call.1} parent=5 // pred_check
        _
      $region34: #{tpu_custom_call.1} parent=5 // pred_check_branch
        %159 = sbr.rel (%p156) target = $region36
      $region35: #{tpu_custom_call.1} parent=5 // pred_region
        %s160 = ssub.s32 %s13, 1
        %p161 = pneg %p34
        %p162 = pneg %p31
        %p163 = pneg %p55
        %p164 = pneg %p52
        %p165 = pneg %p76
        %p166 = pneg %p73
        %p167 = pneg %p97
        %p168 = pneg %p94
        %p169 = pneg %p123
        %p170 = pneg %p120
        %s171 = sand.u32 %s110, 1
        %s172 = scalar_lea.sflag [#allocation3], %s171
        %s173 = sand.u32 %s110, 1
        %s174 = smul.addr %s173, 128
        %s175 = scalar_lea.vmem [#allocation2], %s174
        %v176 = vld [vmem:[%s0] sm:$0xff]
        %v177 = vld [vmem:[%s0 + $0x8] sm:$0xff]
        %v178 = vld [vmem:[%s0 + $0x10] sm:$0xff]
        %v179 = vld [vmem:[%s0 + $0x18] sm:$0xff]
        %v180 = vld [vmem:[%s2] sm:$0xff]
        %v181 = vld [vmem:[%s2 + $0x8] sm:$0xff]
        %v182 = vld [vmem:[%s2 + $0x10] sm:$0xff]
        %v183 = vld [vmem:[%s2 + $0x18] sm:$0xff]
        %vm184 = vcmask 130048
        %v186 = vsel %vm184, %v176, 0
        %v189 = vsel %vm184, %v177, 0
        %v192 = vsel %vm184, %v178, 0
        %v195 = vsel %vm184, %v179, 0
        %197 = vmatprep.subr.mxu0 0.0
        %198 = vmatpush1.msra.mxu0 0.0
        %199 = vmatprep.subr.mxu0 0.0
        %200 = vmatpush1.msra.mxu0 0.0
        %201 = vmatprep.subr.mxu0 0.0
        %202 = vmatpush1.msra.mxu0 0.0
        %203 = vmatprep.subr.mxu0 0.0
        %204 = vmatpush1.msra.mxu0 0.0
        %205 = vmatprep.subr.mxu0 0.0
        %206 = vmatpush1.msra.mxu0 0.0
        %207 = vmatprep.subr.mxu0 0.0
        %208 = vmatpush1.msra.mxu0 0.0
        %209 = vmatprep.subr.mxu0 0.0
        %210 = vmatpush1.msra.mxu0 0.0
        %211 = vmatprep.subr.mxu0 0.0
        %212 = vmatpush1.msra.mxu0 0.0
        %213 = vmatprep.subr.mxu0 0.0
        %214 = vmatpush1.msra.mxu0 0.0
        %215 = vmatprep.subr.mxu0 0.0
        %216 = vmatpush1.msra.mxu0 0.0
        %217 = vmatprep.subr.mxu0 0.0
        %218 = vmatpush1.msra.mxu0 0.0
        %219 = vmatprep.subr.mxu0 0.0
        %220 = vmatpush1.msra.mxu0 0.0
        %221 = vmatprep.subr.mxu0 0.0
        %222 = vmatpush1.msra.mxu0 0.0
        %223 = vmatprep.subr.mxu0 0.0
        %224 = vmatpush1.msra.mxu0 0.0
        %v225 = vand.u32 %v183, 4294901760
        %226 = vmatprep.subr.mxu0 %v225
        %v227 = vand.u32 %v182, 4294901760
        %228 = vmatpush1.msra.mxu0 %v227
        %v229 = vand.u32 %v181, 4294901760
        %230 = vmatprep.subr.mxu0 %v229
        %v231 = vand.u32 %v180, 4294901760
        %232 = vmatpush1.msra.mxu0 %v231
        %233 = vmatprep.subr.mxu0 0.0
        %234 = vmatpush2.msra.mxu0 0.0
        %235 = vmatprep.subr.mxu0 0.0
        %236 = vmatpush2.msra.mxu0 0.0
        %237 = vmatprep.subr.mxu0 0.0
        %238 = vmatpush2.msra.mxu0 0.0
        %239 = vmatprep.subr.mxu0 0.0
        %240 = vmatpush2.msra.mxu0 0.0
        %241 = vmatprep.subr.mxu0 0.0
        %242 = vmatpush2.msra.mxu0 0.0
        %243 = vmatprep.subr.mxu0 0.0
        %244 = vmatpush2.msra.mxu0 0.0
        %245 = vmatprep.subr.mxu0 0.0
        %246 = vmatpush2.msra.mxu0 0.0
        %247 = vmatprep.subr.mxu0 0.0
        %248 = vmatpush2.msra.mxu0 0.0
        %249 = vmatprep.subr.mxu0 0.0
        %250 = vmatpush2.msra.mxu0 0.0
        %251 = vmatprep.subr.mxu0 0.0
        %252 = vmatpush2.msra.mxu0 0.0
        %253 = vmatprep.subr.mxu0 0.0
        %254 = vmatpush2.msra.mxu0 0.0
        %255 = vmatprep.subr.mxu0 0.0
        %256 = vmatpush2.msra.mxu0 0.0
        %257 = vmatprep.subr.mxu0 0.0
        %258 = vmatpush2.msra.mxu0 0.0
        %259 = vmatprep.subr.mxu0 0.0
        %260 = vmatpush2.msra.mxu0 0.0
        %261 = vmatprep.subr.mxu0 0.0
        %262 = vmatpush2.msra.mxu0 0.0
        %263 = vmatprep.subr.mxu0 0.0
        %264 = vmatpush2.msra.mxu0 0.0
        %265 = vmatprep.mubr.f32.mxu0 0.0
        %v266 = vand.u32 %v186, 4294901760
        %v267 = vsub.f32 %v186, %v266
        %v268 = vand.u32 %v267, 4294901760
        %v269 = vsub.f32 %v267, %v268
        %v270 = vand.u32 %v269, 4294901760
        %271 = vmatmul.mubr.f32.gmra.mxu0 %v270
        %v272 = vpop.f32.mrf.mxu0
        %v273 = vadd.f32 0.0, %v272
        %v274 = vpop.f32.mrf.mxu0
        %v275 = vadd.f32 0.0, %v274
        %276 = vmatprep.mubr.f32.mxu0 0.0
        %v277 = vand.u32 %v189, 4294901760
        %v278 = vsub.f32 %v189, %v277
        %v279 = vand.u32 %v278, 4294901760
        %v280 = vsub.f32 %v278, %v279
        %v281 = vand.u32 %v280, 4294901760
        %282 = vmatmul.mubr.f32.gmra.mxu0 %v281
        %v283 = vpop.f32.mrf.mxu0
        %v284 = vadd.f32 0.0, %v283
        %v285 = vpop.f32.mrf.mxu0
        %v286 = vadd.f32 0.0, %v285
        %287 = vmatprep.mubr.f32.mxu0 0.0
        %v288 = vand.u32 %v192, 4294901760
        %v289 = vsub.f32 %v192, %v288
        %v290 = vand.u32 %v289, 4294901760
        %v291 = vsub.f32 %v289, %v290
        %v292 = vand.u32 %v291, 4294901760
        %293 = vmatmul.mubr.f32.gmra.mxu0 %v292
        %v294 = vpop.f32.mrf.mxu0
        %v295 = vadd.f32 0.0, %v294
        %v296 = vpop.f32.mrf.mxu0
        %v297 = vadd.f32 0.0, %v296
        %298 = vmatprep.mubr.f32.mxu0 0.0
        %v299 = vand.u32 %v195, 4294901760
        %v300 = vsub.f32 %v195, %v299
        %v301 = vand.u32 %v300, 4294901760
        %v302 = vsub.f32 %v300, %v301
        %v303 = vand.u32 %v302, 4294901760
        %304 = vmatmul.mubr.f32.gmra.mxu0 %v303
        %v305 = vpop.f32.mrf.mxu0
        %v306 = vadd.f32 0.0, %v305
        %v307 = vpop.f32.mrf.mxu0
        %v308 = vadd.f32 0.0, %v307
        %309 = vdwg.mxu0
        %310 = vmatprep.subr.mxu0 0.0
        %311 = vmatpush1.msra.mxu0 0.0
        %312 = vmatprep.subr.mxu0 0.0
        %313 = vmatpush1.msra.mxu0 0.0
        %314 = vmatprep.subr.mxu0 0.0
        %315 = vmatpush1.msra.mxu0 0.0
        %316 = vmatprep.subr.mxu0 0.0
        %317 = vmatpush1.msra.mxu0 0.0
        %318 = vmatprep.subr.mxu0 0.0
        %319 = vmatpush1.msra.mxu0 0.0
        %320 = vmatprep.subr.mxu0 0.0
        %321 = vmatpush1.msra.mxu0 0.0
        %322 = vmatprep.subr.mxu0 0.0
        %323 = vmatpush1.msra.mxu0 0.0
        %324 = vmatprep.subr.mxu0 0.0
        %325 = vmatpush1.msra.mxu0 0.0
        %326 = vmatprep.subr.mxu0 0.0
        %327 = vmatpush1.msra.mxu0 0.0
        %328 = vmatprep.subr.mxu0 0.0
        %329 = vmatpush1.msra.mxu0 0.0
        %330 = vmatprep.subr.mxu0 0.0
        %331 = vmatpush1.msra.mxu0 0.0
        %332 = vmatprep.subr.mxu0 0.0
        %333 = vmatpush1.msra.mxu0 0.0
        %334 = vmatprep.subr.mxu0 0.0
        %335 = vmatpush1.msra.mxu0 0.0
        %336 = vmatprep.subr.mxu0 0.0
        %337 = vmatpush1.msra.mxu0 0.0
        %v338 = vand.u32 %v183, 4294901760
        %v339 = vsub.f32 %v183, %v338
        %v340 = vand.u32 %v339, 4294901760
        %v341 = vsub.f32 %v339, %v340
        %v342 = vand.u32 %v341, 4294901760
        %343 = vmatprep.subr.mxu0 %v342
        %v344 = vand.u32 %v182, 4294901760
        %v345 = vsub.f32 %v182, %v344
        %v346 = vand.u32 %v345, 4294901760
        %v347 = vsub.f32 %v345, %v346
        %v348 = vand.u32 %v347, 4294901760
        %349 = vmatpush1.msra.mxu0 %v348
        %v350 = vand.u32 %v181, 4294901760
        %v351 = vsub.f32 %v181, %v350
        %v352 = vand.u32 %v351, 4294901760
        %v353 = vsub.f32 %v351, %v352
        %v354 = vand.u32 %v353, 4294901760
        %355 = vmatprep.subr.mxu0 %v354
        %v356 = vand.u32 %v180, 4294901760
        %v357 = vsub.f32 %v180, %v356
        %v358 = vand.u32 %v357, 4294901760
        %v359 = vsub.f32 %v357, %v358
        %v360 = vand.u32 %v359, 4294901760
        %361 = vmatpush1.msra.mxu0 %v360
        %362 = vmatprep.subr.mxu0 0.0
        %363 = vmatpush2.msra.mxu0 0.0
        %364 = vmatprep.subr.mxu0 0.0
        %365 = vmatpush2.msra.mxu0 0.0
        %366 = vmatprep.subr.mxu0 0.0
        %367 = vmatpush2.msra.mxu0 0.0
        %368 = vmatprep.subr.mxu0 0.0
        %369 = vmatpush2.msra.mxu0 0.0
        %370 = vmatprep.subr.mxu0 0.0
        %371 = vmatpush2.msra.mxu0 0.0
        %372 = vmatprep.subr.mxu0 0.0
        %373 = vmatpush2.msra.mxu0 0.0
        %374 = vmatprep.subr.mxu0 0.0
        %375 = vmatpush2.msra.mxu0 0.0
        %376 = vmatprep.subr.mxu0 0.0
        %377 = vmatpush2.msra.mxu0 0.0
        %378 = vmatprep.subr.mxu0 0.0
        %379 = vmatpush2.msra.mxu0 0.0
        %380 = vmatprep.subr.mxu0 0.0
        %381 = vmatpush2.msra.mxu0 0.0
        %382 = vmatprep.subr.mxu0 0.0
        %383 = vmatpush2.msra.mxu0 0.0
        %384 = vmatprep.subr.mxu0 0.0
        %385 = vmatpush2.msra.mxu0 0.0
        %386 = vmatprep.subr.mxu0 0.0
        %387 = vmatpush2.msra.mxu0 0.0
        %388 = vmatprep.subr.mxu0 0.0
        %389 = vmatpush2.msra.mxu0 0.0
        %390 = vmatprep.subr.mxu0 0.0
        %391 = vmatpush2.msra.mxu0 0.0
        %392 = vmatprep.subr.mxu0 0.0
        %393 = vmatpush2.msra.mxu0 0.0
        %394 = vmatprep.mubr.f32.mxu0 0.0
        %v395 = vand.u32 %v186, 4294901760
        %396 = vmatmul.mubr.f32.gmra.mxu0 %v395
        %v397 = vpop.f32.mrf.mxu0
        %v398 = vadd.f32 %v273, %v397
        %v399 = vpop.f32.mrf.mxu0
        %v400 = vadd.f32 %v275, %v399
        %401 = vmatprep.mubr.f32.mxu0 0.0
        %v402 = vand.u32 %v189, 4294901760
        %403 = vmatmul.mubr.f32.gmra.mxu0 %v402
        %v404 = vpop.f32.mrf.mxu0
        %v405 = vadd.f32 %v284, %v404
        %v406 = vpop.f32.mrf.mxu0
        %v407 = vadd.f32 %v286, %v406
        %408 = vmatprep.mubr.f32.mxu0 0.0
        %v409 = vand.u32 %v192, 4294901760
        %410 = vmatmul.mubr.f32.gmra.mxu0 %v409
        %v411 = vpop.f32.mrf.mxu0
        %v412 = vadd.f32 %v295, %v411
        %v413 = vpop.f32.mrf.mxu0
        %v414 = vadd.f32 %v297, %v413
        %415 = vmatprep.mubr.f32.mxu0 0.0
        %v416 = vand.u32 %v195, 4294901760
        %417 = vmatmul.mubr.f32.gmra.mxu0 %v416
        %v418 = vpop.f32.mrf.mxu0
        %v419 = vadd.f32 %v306, %v418
        %v420 = vpop.f32.mrf.mxu0
        %v421 = vadd.f32 %v308, %v420
        %422 = vdwg.mxu0
        %423 = vmatprep.subr.mxu0 0.0
        %424 = vmatpush1.msra.mxu0 0.0
        %425 = vmatprep.subr.mxu0 0.0
        %426 = vmatpush1.msra.mxu0 0.0
        %427 = vmatprep.subr.mxu0 0.0
        %428 = vmatpush1.msra.mxu0 0.0
        %429 = vmatprep.subr.mxu0 0.0
        %430 = vmatpush1.msra.mxu0 0.0
        %431 = vmatprep.subr.mxu0 0.0
        %432 = vmatpush1.msra.mxu0 0.0
        %433 = vmatprep.subr.mxu0 0.0
        %434 = vmatpush1.msra.mxu0 0.0
        %435 = vmatprep.subr.mxu0 0.0
        %436 = vmatpush1.msra.mxu0 0.0
        %437 = vmatprep.subr.mxu0 0.0
        %438 = vmatpush1.msra.mxu0 0.0
        %439 = vmatprep.subr.mxu0 0.0
        %440 = vmatpush1.msra.mxu0 0.0
        %441 = vmatprep.subr.mxu0 0.0
        %442 = vmatpush1.msra.mxu0 0.0
        %443 = vmatprep.subr.mxu0 0.0
        %444 = vmatpush1.msra.mxu0 0.0
        %445 = vmatprep.subr.mxu0 0.0
        %446 = vmatpush1.msra.mxu0 0.0
        %447 = vmatprep.subr.mxu0 0.0
        %448 = vmatpush1.msra.mxu0 0.0
        %449 = vmatprep.subr.mxu0 0.0
        %450 = vmatpush1.msra.mxu0 0.0
        %v451 = vand.u32 %v183, 4294901760
        %v452 = vsub.f32 %v183, %v451
        %453 = vmatprep.subr.mxu0 %v452
        %v454 = vand.u32 %v182, 4294901760
        %v455 = vsub.f32 %v182, %v454
        %456 = vmatpush1.msra.mxu0 %v455
        %v457 = vand.u32 %v181, 4294901760
        %v458 = vsub.f32 %v181, %v457
        %459 = vmatprep.subr.mxu0 %v458
        %v460 = vand.u32 %v180, 4294901760
        %v461 = vsub.f32 %v180, %v460
        %462 = vmatpush1.msra.mxu0 %v461
        %463 = vmatprep.subr.mxu0 0.0
        %464 = vmatpush2.msra.mxu0 0.0
        %465 = vmatprep.subr.mxu0 0.0
        %466 = vmatpush2.msra.mxu0 0.0
        %467 = vmatprep.subr.mxu0 0.0
        %468 = vmatpush2.msra.mxu0 0.0
        %469 = vmatprep.subr.mxu0 0.0
        %470 = vmatpush2.msra.mxu0 0.0
        %471 = vmatprep.subr.mxu0 0.0
        %472 = vmatpush2.msra.mxu0 0.0
        %473 = vmatprep.subr.mxu0 0.0
        %474 = vmatpush2.msra.mxu0 0.0
        %475 = vmatprep.subr.mxu0 0.0
        %476 = vmatpush2.msra.mxu0 0.0
        %477 = vmatprep.subr.mxu0 0.0
        %478 = vmatpush2.msra.mxu0 0.0
        %479 = vmatprep.subr.mxu0 0.0
        %480 = vmatpush2.msra.mxu0 0.0
        %481 = vmatprep.subr.mxu0 0.0
        %482 = vmatpush2.msra.mxu0 0.0
        %483 = vmatprep.subr.mxu0 0.0
        %484 = vmatpush2.msra.mxu0 0.0
        %485 = vmatprep.subr.mxu0 0.0
        %486 = vmatpush2.msra.mxu0 0.0
        %487 = vmatprep.subr.mxu0 0.0
        %488 = vmatpush2.msra.mxu0 0.0
        %489 = vmatprep.subr.mxu0 0.0
        %490 = vmatpush2.msra.mxu0 0.0
        %491 = vmatprep.subr.mxu0 0.0
        %492 = vmatpush2.msra.mxu0 0.0
        %493 = vmatprep.subr.mxu0 0.0
        %494 = vmatpush2.msra.mxu0 0.0
        %495 = vmatprep.mubr.f32.mxu0 0.0
        %v496 = vand.u32 %v186, 4294901760
        %v497 = vsub.f32 %v186, %v496
        %498 = vmatmul.mubr.f32.gmra.mxu0 %v497
        %v499 = vpop.f32.mrf.mxu0
        %v500 = vadd.f32 %v398, %v499
        %v501 = vpop.f32.mrf.mxu0
        %v502 = vadd.f32 %v400, %v501
        %503 = vmatprep.mubr.f32.mxu0 0.0
        %v504 = vand.u32 %v189, 4294901760
        %v505 = vsub.f32 %v189, %v504
        %506 = vmatmul.mubr.f32.gmra.mxu0 %v505
        %v507 = vpop.f32.mrf.mxu0
        %v508 = vadd.f32 %v405, %v507
        %v509 = vpop.f32.mrf.mxu0
        %v510 = vadd.f32 %v407, %v509
        %511 = vmatprep.mubr.f32.mxu0 0.0
        %v512 = vand.u32 %v192, 4294901760
        %v513 = vsub.f32 %v192, %v512
        %514 = vmatmul.mubr.f32.gmra.mxu0 %v513
        %v515 = vpop.f32.mrf.mxu0
        %v516 = vadd.f32 %v412, %v515
        %v517 = vpop.f32.mrf.mxu0
        %v518 = vadd.f32 %v414, %v517
        %519 = vmatprep.mubr.f32.mxu0 0.0
        %v520 = vand.u32 %v195, 4294901760
        %v521 = vsub.f32 %v195, %v520
        %522 = vmatmul.mubr.f32.gmra.mxu0 %v521
        %v523 = vpop.f32.mrf.mxu0
        %v524 = vadd.f32 %v419, %v523
        %v525 = vpop.f32.mrf.mxu0
        %v526 = vadd.f32 %v421, %v525
        %527 = vdwg.mxu0
        %528 = vmatprep.subr.mxu0 0.0
        %529 = vmatpush1.msra.mxu0 0.0
        %530 = vmatprep.subr.mxu0 0.0
        %531 = vmatpush1.msra.mxu0 0.0
        %532 = vmatprep.subr.mxu0 0.0
        %533 = vmatpush1.msra.mxu0 0.0
        %534 = vmatprep.subr.mxu0 0.0
        %535 = vmatpush1.msra.mxu0 0.0
        %536 = vmatprep.subr.mxu0 0.0
        %537 = vmatpush1.msra.mxu0 0.0
        %538 = vmatprep.subr.mxu0 0.0
        %539 = vmatpush1.msra.mxu0 0.0
        %540 = vmatprep.subr.mxu0 0.0
        %541 = vmatpush1.msra.mxu0 0.0
        %542 = vmatprep.subr.mxu0 0.0
        %543 = vmatpush1.msra.mxu0 0.0
        %544 = vmatprep.subr.mxu0 0.0
        %545 = vmatpush1.msra.mxu0 0.0
        %546 = vmatprep.subr.mxu0 0.0
        %547 = vmatpush1.msra.mxu0 0.0
        %548 = vmatprep.subr.mxu0 0.0
        %549 = vmatpush1.msra.mxu0 0.0
        %550 = vmatprep.subr.mxu0 0.0
        %551 = vmatpush1.msra.mxu0 0.0
        %552 = vmatprep.subr.mxu0 0.0
        %553 = vmatpush1.msra.mxu0 0.0
        %554 = vmatprep.subr.mxu0 0.0
        %555 = vmatpush1.msra.mxu0 0.0
        %v556 = vand.u32 %v183, 4294901760
        %557 = vmatprep.subr.mxu0 %v556
        %v558 = vand.u32 %v182, 4294901760
        %559 = vmatpush1.msra.mxu0 %v558
        %v560 = vand.u32 %v181, 4294901760
        %561 = vmatprep.subr.mxu0 %v560
        %v562 = vand.u32 %v180, 4294901760
        %563 = vmatpush1.msra.mxu0 %v562
        %564 = vmatprep.subr.mxu0 0.0
        %565 = vmatpush2.msra.mxu0 0.0
        %566 = vmatprep.subr.mxu0 0.0
        %567 = vmatpush2.msra.mxu0 0.0
        %568 = vmatprep.subr.mxu0 0.0
        %569 = vmatpush2.msra.mxu0 0.0
        %570 = vmatprep.subr.mxu0 0.0
        %571 = vmatpush2.msra.mxu0 0.0
        %572 = vmatprep.subr.mxu0 0.0
        %573 = vmatpush2.msra.mxu0 0.0
        %574 = vmatprep.subr.mxu0 0.0
        %575 = vmatpush2.msra.mxu0 0.0
        %576 = vmatprep.subr.mxu0 0.0
        %577 = vmatpush2.msra.mxu0 0.0
        %578 = vmatprep.subr.mxu0 0.0
        %579 = vmatpush2.msra.mxu0 0.0
        %580 = vmatprep.subr.mxu0 0.0
        %581 = vmatpush2.msra.mxu0 0.0
        %582 = vmatprep.subr.mxu0 0.0
        %583 = vmatpush2.msra.mxu0 0.0
        %584 = vmatprep.subr.mxu0 0.0
        %585 = vmatpush2.msra.mxu0 0.0
        %586 = vmatprep.subr.mxu0 0.0
        %587 = vmatpush2.msra.mxu0 0.0
        %588 = vmatprep.subr.mxu0 0.0
        %589 = vmatpush2.msra.mxu0 0.0
        %590 = vmatprep.subr.mxu0 0.0
        %591 = vmatpush2.msra.mxu0 0.0
        %592 = vmatprep.subr.mxu0 0.0
        %593 = vmatpush2.msra.mxu0 0.0
        %594 = vmatprep.subr.mxu0 0.0
        %595 = vmatpush2.msra.mxu0 0.0
        %596 = vmatprep.mubr.f32.mxu0 0.0
        %v597 = vand.u32 %v186, 4294901760
        %v598 = vsub.f32 %v186, %v597
        %v599 = vand.u32 %v598, 4294901760
        %600 = vmatmul.mubr.f32.gmra.mxu0 %v599
        %v601 = vpop.f32.mrf.mxu0
        %v602 = vadd.f32 %v500, %v601
        %v603 = vpop.f32.mrf.mxu0
        %v604 = vadd.f32 %v502, %v603
        %605 = vmatprep.mubr.f32.mxu0 0.0
        %v606 = vand.u32 %v189, 4294901760
        %v607 = vsub.f32 %v189, %v606
        %v608 = vand.u32 %v607, 4294901760
        %609 = vmatmul.mubr.f32.gmra.mxu0 %v608
        %v610 = vpop.f32.mrf.mxu0
        %v611 = vadd.f32 %v508, %v610
        %v612 = vpop.f32.mrf.mxu0
        %v613 = vadd.f32 %v510, %v612
        %614 = vmatprep.mubr.f32.mxu0 0.0
        %v615 = vand.u32 %v192, 4294901760
        %v616 = vsub.f32 %v192, %v615
        %v617 = vand.u32 %v616, 4294901760
        %618 = vmatmul.mubr.f32.gmra.mxu0 %v617
        %v619 = vpop.f32.mrf.mxu0
        %v620 = vadd.f32 %v516, %v619
        %v621 = vpop.f32.mrf.mxu0
        %v622 = vadd.f32 %v518, %v621
        %623 = vmatprep.mubr.f32.mxu0 0.0
        %v624 = vand.u32 %v195, 4294901760
        %v625 = vsub.f32 %v195, %v624
        %v626 = vand.u32 %v625, 4294901760
        %627 = vmatmul.mubr.f32.gmra.mxu0 %v626
        %v628 = vpop.f32.mrf.mxu0
        %v629 = vadd.f32 %v524, %v628
        %v630 = vpop.f32.mrf.mxu0
        %v631 = vadd.f32 %v526, %v630
        %632 = vdwg.mxu0
        %633 = vmatprep.subr.mxu0 0.0
        %634 = vmatpush1.msra.mxu0 0.0
        %635 = vmatprep.subr.mxu0 0.0
        %636 = vmatpush1.msra.mxu0 0.0
        %637 = vmatprep.subr.mxu0 0.0
        %638 = vmatpush1.msra.mxu0 0.0
        %639 = vmatprep.subr.mxu0 0.0
        %640 = vmatpush1.msra.mxu0 0.0
        %641 = vmatprep.subr.mxu0 0.0
        %642 = vmatpush1.msra.mxu0 0.0
        %643 = vmatprep.subr.mxu0 0.0
        %644 = vmatpush1.msra.mxu0 0.0
        %645 = vmatprep.subr.mxu0 0.0
        %646 = vmatpush1.msra.mxu0 0.0
        %647 = vmatprep.subr.mxu0 0.0
        %648 = vmatpush1.msra.mxu0 0.0
        %649 = vmatprep.subr.mxu0 0.0
        %650 = vmatpush1.msra.mxu0 0.0
        %651 = vmatprep.subr.mxu0 0.0
        %652 = vmatpush1.msra.mxu0 0.0
        %653 = vmatprep.subr.mxu0 0.0
        %654 = vmatpush1.msra.mxu0 0.0
        %655 = vmatprep.subr.mxu0 0.0
        %656 = vmatpush1.msra.mxu0 0.0
        %657 = vmatprep.subr.mxu0 0.0
        %658 = vmatpush1.msra.mxu0 0.0
        %659 = vmatprep.subr.mxu0 0.0
        %660 = vmatpush1.msra.mxu0 0.0
        %v661 = vand.u32 %v183, 4294901760
        %v662 = vsub.f32 %v183, %v661
        %v663 = vand.u32 %v662, 4294901760
        %664 = vmatprep.subr.mxu0 %v663
        %v665 = vand.u32 %v182, 4294901760
        %v666 = vsub.f32 %v182, %v665
        %v667 = vand.u32 %v666, 4294901760
        %668 = vmatpush1.msra.mxu0 %v667
        %v669 = vand.u32 %v181, 4294901760
        %v670 = vsub.f32 %v181, %v669
        %v671 = vand.u32 %v670, 4294901760
        %672 = vmatprep.subr.mxu0 %v671
        %v673 = vand.u32 %v180, 4294901760
        %v674 = vsub.f32 %v180, %v673
        %v675 = vand.u32 %v674, 4294901760
        %676 = vmatpush1.msra.mxu0 %v675
        %677 = vmatprep.subr.mxu0 0.0
        %678 = vmatpush2.msra.mxu0 0.0
        %679 = vmatprep.subr.mxu0 0.0
        %680 = vmatpush2.msra.mxu0 0.0
        %681 = vmatprep.subr.mxu0 0.0
        %682 = vmatpush2.msra.mxu0 0.0
        %683 = vmatprep.subr.mxu0 0.0
        %684 = vmatpush2.msra.mxu0 0.0
        %685 = vmatprep.subr.mxu0 0.0
        %686 = vmatpush2.msra.mxu0 0.0
        %687 = vmatprep.subr.mxu0 0.0
        %688 = vmatpush2.msra.mxu0 0.0
        %689 = vmatprep.subr.mxu0 0.0
        %690 = vmatpush2.msra.mxu0 0.0
        %691 = vmatprep.subr.mxu0 0.0
        %692 = vmatpush2.msra.mxu0 0.0
        %693 = vmatprep.subr.mxu0 0.0
        %694 = vmatpush2.msra.mxu0 0.0
        %695 = vmatprep.subr.mxu0 0.0
        %696 = vmatpush2.msra.mxu0 0.0
        %697 = vmatprep.subr.mxu0 0.0
        %698 = vmatpush2.msra.mxu0 0.0
        %699 = vmatprep.subr.mxu0 0.0
        %700 = vmatpush2.msra.mxu0 0.0
        %701 = vmatprep.subr.mxu0 0.0
        %702 = vmatpush2.msra.mxu0 0.0
        %703 = vmatprep.subr.mxu0 0.0
        %704 = vmatpush2.msra.mxu0 0.0
        %705 = vmatprep.subr.mxu0 0.0
        %706 = vmatpush2.msra.mxu0 0.0
        %707 = vmatprep.subr.mxu0 0.0
        %708 = vmatpush2.msra.mxu0 0.0
        %709 = vmatprep.mubr.f32.mxu0 0.0
        %v710 = vand.u32 %v186, 4294901760
        %711 = vmatmul.mubr.f32.gmra.mxu0 %v710
        %v712 = vpop.f32.mrf.mxu0
        %v713 = vadd.f32 %v602, %v712
        %v714 = vpop.f32.mrf.mxu0
        %v715 = vadd.f32 %v604, %v714
        %716 = vmatprep.mubr.f32.mxu0 0.0
        %v717 = vand.u32 %v189, 4294901760
        %718 = vmatmul.mubr.f32.gmra.mxu0 %v717
        %v719 = vpop.f32.mrf.mxu0
        %v720 = vadd.f32 %v611, %v719
        %v721 = vpop.f32.mrf.mxu0
        %v722 = vadd.f32 %v613, %v721
        %723 = vmatprep.mubr.f32.mxu0 0.0
        %v724 = vand.u32 %v192, 4294901760
        %725 = vmatmul.mubr.f32.gmra.mxu0 %v724
        %v726 = vpop.f32.mrf.mxu0
        %v727 = vadd.f32 %v620, %v726
        %v728 = vpop.f32.mrf.mxu0
        %v729 = vadd.f32 %v622, %v728
        %730 = vmatprep.mubr.f32.mxu0 0.0
        %v731 = vand.u32 %v195, 4294901760
        %732 = vmatmul.mubr.f32.gmra.mxu0 %v731
        %v733 = vpop.f32.mrf.mxu0
        %v734 = vadd.f32 %v629, %v733
        %v735 = vpop.f32.mrf.mxu0
        %v736 = vadd.f32 %v631, %v735
        %737 = vdwg.mxu0
        %738 = vmatprep.subr.mxu0 0.0
        %739 = vmatpush1.msra.mxu0 0.0
        %740 = vmatprep.subr.mxu0 0.0
        %741 = vmatpush1.msra.mxu0 0.0
        %742 = vmatprep.subr.mxu0 0.0
        %743 = vmatpush1.msra.mxu0 0.0
        %744 = vmatprep.subr.mxu0 0.0
        %745 = vmatpush1.msra.mxu0 0.0
        %746 = vmatprep.subr.mxu0 0.0
        %747 = vmatpush1.msra.mxu0 0.0
        %748 = vmatprep.subr.mxu0 0.0
        %749 = vmatpush1.msra.mxu0 0.0
        %750 = vmatprep.subr.mxu0 0.0
        %751 = vmatpush1.msra.mxu0 0.0
        %752 = vmatprep.subr.mxu0 0.0
        %753 = vmatpush1.msra.mxu0 0.0
        %754 = vmatprep.subr.mxu0 0.0
        %755 = vmatpush1.msra.mxu0 0.0
        %756 = vmatprep.subr.mxu0 0.0
        %757 = vmatpush1.msra.mxu0 0.0
        %758 = vmatprep.subr.mxu0 0.0
        %759 = vmatpush1.msra.mxu0 0.0
        %760 = vmatprep.subr.mxu0 0.0
        %761 = vmatpush1.msra.mxu0 0.0
        %762 = vmatprep.subr.mxu0 0.0
        %763 = vmatpush1.msra.mxu0 0.0
        %764 = vmatprep.subr.mxu0 0.0
        %765 = vmatpush1.msra.mxu0 0.0
        %v766 = vand.u32 %v183, 4294901760
        %767 = vmatprep.subr.mxu0 %v766
        %v768 = vand.u32 %v182, 4294901760
        %769 = vmatpush1.msra.mxu0 %v768
        %v770 = vand.u32 %v181, 4294901760
        %771 = vmatprep.subr.mxu0 %v770
        %v772 = vand.u32 %v180, 4294901760
        %773 = vmatpush1.msra.mxu0 %v772
        %774 = vmatprep.subr.mxu0 0.0
        %775 = vmatpush2.msra.mxu0 0.0
        %776 = vmatprep.subr.mxu0 0.0
        %777 = vmatpush2.msra.mxu0 0.0
        %778 = vmatprep.subr.mxu0 0.0
        %779 = vmatpush2.msra.mxu0 0.0
        %780 = vmatprep.subr.mxu0 0.0
        %781 = vmatpush2.msra.mxu0 0.0
        %782 = vmatprep.subr.mxu0 0.0
        %783 = vmatpush2.msra.mxu0 0.0
        %784 = vmatprep.subr.mxu0 0.0
        %785 = vmatpush2.msra.mxu0 0.0
        %786 = vmatprep.subr.mxu0 0.0
        %787 = vmatpush2.msra.mxu0 0.0
        %788 = vmatprep.subr.mxu0 0.0
        %789 = vmatpush2.msra.mxu0 0.0
        %790 = vmatprep.subr.mxu0 0.0
        %791 = vmatpush2.msra.mxu0 0.0
        %792 = vmatprep.subr.mxu0 0.0
        %793 = vmatpush2.msra.mxu0 0.0
        %794 = vmatprep.subr.mxu0 0.0
        %795 = vmatpush2.msra.mxu0 0.0
        %796 = vmatprep.subr.mxu0 0.0
        %797 = vmatpush2.msra.mxu0 0.0
        %798 = vmatprep.subr.mxu0 0.0
        %799 = vmatpush2.msra.mxu0 0.0
        %800 = vmatprep.subr.mxu0 0.0
        %801 = vmatpush2.msra.mxu0 0.0
        %802 = vmatprep.subr.mxu0 0.0
        %803 = vmatpush2.msra.mxu0 0.0
        %804 = vmatprep.subr.mxu0 0.0
        %805 = vmatpush2.msra.mxu0 0.0
        %806 = vmatprep.mubr.f32.mxu0 0.0
        %v807 = vand.u32 %v186, 4294901760
        %808 = vmatmul.mubr.f32.gmra.mxu0 %v807
        %v809 = vpop.f32.mrf.mxu0
        %v810 = vadd.f32 %v713, %v809
        %v811 = vpop.f32.mrf.mxu0
        %v812 = vadd.f32 %v715, %v811
        %813 = vmatprep.mubr.f32.mxu0 0.0
        %v814 = vand.u32 %v189, 4294901760
        %815 = vmatmul.mubr.f32.gmra.mxu0 %v814
        %v816 = vpop.f32.mrf.mxu0
        %v817 = vadd.f32 %v720, %v816
        %v818 = vpop.f32.mrf.mxu0
        %v819 = vadd.f32 %v722, %v818
        %820 = vmatprep.mubr.f32.mxu0 0.0
        %v821 = vand.u32 %v192, 4294901760
        %822 = vmatmul.mubr.f32.gmra.mxu0 %v821
        %v823 = vpop.f32.mrf.mxu0
        %v824 = vadd.f32 %v727, %v823
        %v825 = vpop.f32.mrf.mxu0
        %v826 = vadd.f32 %v729, %v825
        %827 = vmatprep.mubr.f32.mxu0 0.0
        %v828 = vand.u32 %v195, 4294901760
        %829 = vmatmul.mubr.f32.gmra.mxu0 %v828
        %v830 = vpop.f32.mrf.mxu0
        %v831 = vadd.f32 %v734, %v830
        %v832 = vpop.f32.mrf.mxu0
        %v833 = vadd.f32 %v736, %v832
        %834 = vdwg.mxu0
        %v835 = vld [vmem:[%s1] sm:$0xff]
        %v836 = vld [vmem:[%s1 + $0x8] sm:$0xff]
        %v837 = vld [vmem:[%s1 + $0x10] sm:$0xff]
        %v838 = vld [vmem:[%s1 + $0x18] sm:$0xff]
        %v839 = vld [vmem:[%s3] sm:$0xff]
        %v840 = vld [vmem:[%s3 + $0x8] sm:$0xff]
        %v841 = vld [vmem:[%s3 + $0x10] sm:$0xff]
        %v842 = vld [vmem:[%s3 + $0x18] sm:$0xff]
        %v844 = vsel %vm184, %v835, 0
        %v847 = vsel %vm184, %v836, 0
        %v850 = vsel %vm184, %v837, 0
        %v853 = vsel %vm184, %v838, 0
        %855 = vmatprep.subr.mxu0 0.0
        %856 = vmatpush1.msra.mxu0 0.0
        %857 = vmatprep.subr.mxu0 0.0
        %858 = vmatpush1.msra.mxu0 0.0
        %859 = vmatprep.subr.mxu0 0.0
        %860 = vmatpush1.msra.mxu0 0.0
        %861 = vmatprep.subr.mxu0 0.0
        %862 = vmatpush1.msra.mxu0 0.0
        %863 = vmatprep.subr.mxu0 0.0
        %864 = vmatpush1.msra.mxu0 0.0
        %865 = vmatprep.subr.mxu0 0.0
        %866 = vmatpush1.msra.mxu0 0.0
        %867 = vmatprep.subr.mxu0 0.0
        %868 = vmatpush1.msra.mxu0 0.0
        %869 = vmatprep.subr.mxu0 0.0
        %870 = vmatpush1.msra.mxu0 0.0
        %871 = vmatprep.subr.mxu0 0.0
        %872 = vmatpush1.msra.mxu0 0.0
        %873 = vmatprep.subr.mxu0 0.0
        %874 = vmatpush1.msra.mxu0 0.0
        %875 = vmatprep.subr.mxu0 0.0
        %876 = vmatpush1.msra.mxu0 0.0
        %877 = vmatprep.subr.mxu0 0.0
        %878 = vmatpush1.msra.mxu0 0.0
        %879 = vmatprep.subr.mxu0 0.0
        %880 = vmatpush1.msra.mxu0 0.0
        %881 = vmatprep.subr.mxu0 0.0
        %882 = vmatpush1.msra.mxu0 0.0
        %v883 = vand.u32 %v842, 4294901760
        %884 = vmatprep.subr.mxu0 %v883
        %v885 = vand.u32 %v841, 4294901760
        %886 = vmatpush1.msra.mxu0 %v885
        %v887 = vand.u32 %v840, 4294901760
        %888 = vmatprep.subr.mxu0 %v887
        %v889 = vand.u32 %v839, 4294901760
        %890 = vmatpush1.msra.mxu0 %v889
        %891 = vmatprep.subr.mxu0 0.0
        %892 = vmatpush2.msra.mxu0 0.0
        %893 = vmatprep.subr.mxu0 0.0
        %894 = vmatpush2.msra.mxu0 0.0
        %895 = vmatprep.subr.mxu0 0.0
        %896 = vmatpush2.msra.mxu0 0.0
        %897 = vmatprep.subr.mxu0 0.0
        %898 = vmatpush2.msra.mxu0 0.0
        %899 = vmatprep.subr.mxu0 0.0
        %900 = vmatpush2.msra.mxu0 0.0
        %901 = vmatprep.subr.mxu0 0.0
        %902 = vmatpush2.msra.mxu0 0.0
        %903 = vmatprep.subr.mxu0 0.0
        %904 = vmatpush2.msra.mxu0 0.0
        %905 = vmatprep.subr.mxu0 0.0
        %906 = vmatpush2.msra.mxu0 0.0
        %907 = vmatprep.subr.mxu0 0.0
        %908 = vmatpush2.msra.mxu0 0.0
        %909 = vmatprep.subr.mxu0 0.0
        %910 = vmatpush2.msra.mxu0 0.0
        %911 = vmatprep.subr.mxu0 0.0
        %912 = vmatpush2.msra.mxu0 0.0
        %913 = vmatprep.subr.mxu0 0.0
        %914 = vmatpush2.msra.mxu0 0.0
        %915 = vmatprep.subr.mxu0 0.0
        %916 = vmatpush2.msra.mxu0 0.0
        %917 = vmatprep.subr.mxu0 0.0
        %918 = vmatpush2.msra.mxu0 0.0
        %919 = vmatprep.subr.mxu0 0.0
        %920 = vmatpush2.msra.mxu0 0.0
        %921 = vmatprep.subr.mxu0 0.0
        %922 = vmatpush2.msra.mxu0 0.0
        %923 = vmatprep.mubr.f32.mxu0 0.0
        %v924 = vand.u32 %v844, 4294901760
        %v925 = vsub.f32 %v844, %v924
        %v926 = vand.u32 %v925, 4294901760
        %v927 = vsub.f32 %v925, %v926
        %v928 = vand.u32 %v927, 4294901760
        %929 = vmatmul.mubr.f32.gmra.mxu0 %v928
        %v930 = vpop.f32.mrf.mxu0
        %v931 = vadd.f32 0.0, %v930
        %v932 = vpop.f32.mrf.mxu0
        %v933 = vadd.f32 0.0, %v932
        %934 = vmatprep.mubr.f32.mxu0 0.0
        %v935 = vand.u32 %v847, 4294901760
        %v936 = vsub.f32 %v847, %v935
        %v937 = vand.u32 %v936, 4294901760
        %v938 = vsub.f32 %v936, %v937
        %v939 = vand.u32 %v938, 4294901760
        %940 = vmatmul.mubr.f32.gmra.mxu0 %v939
        %v941 = vpop.f32.mrf.mxu0
        %v942 = vadd.f32 0.0, %v941
        %v943 = vpop.f32.mrf.mxu0
        %v944 = vadd.f32 0.0, %v943
        %945 = vmatprep.mubr.f32.mxu0 0.0
        %v946 = vand.u32 %v850, 4294901760
        %v947 = vsub.f32 %v850, %v946
        %v948 = vand.u32 %v947, 4294901760
        %v949 = vsub.f32 %v947, %v948
        %v950 = vand.u32 %v949, 4294901760
        %951 = vmatmul.mubr.f32.gmra.mxu0 %v950
        %v952 = vpop.f32.mrf.mxu0
        %v953 = vadd.f32 0.0, %v952
        %v954 = vpop.f32.mrf.mxu0
        %v955 = vadd.f32 0.0, %v954
        %956 = vmatprep.mubr.f32.mxu0 0.0
        %v957 = vand.u32 %v853, 4294901760
        %v958 = vsub.f32 %v853, %v957
        %v959 = vand.u32 %v958, 4294901760
        %v960 = vsub.f32 %v958, %v959
        %v961 = vand.u32 %v960, 4294901760
        %962 = vmatmul.mubr.f32.gmra.mxu0 %v961
        %v963 = vpop.f32.mrf.mxu0
        %v964 = vadd.f32 0.0, %v963
        %v965 = vpop.f32.mrf.mxu0
        %v966 = vadd.f32 0.0, %v965
        %967 = vdwg.mxu0
        %968 = vmatprep.subr.mxu0 0.0
        %969 = vmatpush1.msra.mxu0 0.0
        %970 = vmatprep.subr.mxu0 0.0
        %971 = vmatpush1.msra.mxu0 0.0
        %972 = vmatprep.subr.mxu0 0.0
        %973 = vmatpush1.msra.mxu0 0.0
        %974 = vmatprep.subr.mxu0 0.0
        %975 = vmatpush1.msra.mxu0 0.0
        %976 = vmatprep.subr.mxu0 0.0
        %977 = vmatpush1.msra.mxu0 0.0
        %978 = vmatprep.subr.mxu0 0.0
        %979 = vmatpush1.msra.mxu0 0.0
        %980 = vmatprep.subr.mxu0 0.0
        %981 = vmatpush1.msra.mxu0 0.0
        %982 = vmatprep.subr.mxu0 0.0
        %983 = vmatpush1.msra.mxu0 0.0
        %984 = vmatprep.subr.mxu0 0.0
        %985 = vmatpush1.msra.mxu0 0.0
        %986 = vmatprep.subr.mxu0 0.0
        %987 = vmatpush1.msra.mxu0 0.0
        %988 = vmatprep.subr.mxu0 0.0
        %989 = vmatpush1.msra.mxu0 0.0
        %990 = vmatprep.subr.mxu0 0.0
        %991 = vmatpush1.msra.mxu0 0.0
        %992 = vmatprep.subr.mxu0 0.0
        %993 = vmatpush1.msra.mxu0 0.0
        %994 = vmatprep.subr.mxu0 0.0
        %995 = vmatpush1.msra.mxu0 0.0
        %v996 = vand.u32 %v842, 4294901760
        %v997 = vsub.f32 %v842, %v996
        %v998 = vand.u32 %v997, 4294901760
        %v999 = vsub.f32 %v997, %v998
        %v1000 = vand.u32 %v999, 4294901760
        %1001 = vmatprep.subr.mxu0 %v1000
        %v1002 = vand.u32 %v841, 4294901760
        %v1003 = vsub.f32 %v841, %v1002
        %v1004 = vand.u32 %v1003, 4294901760
        %v1005 = vsub.f32 %v1003, %v1004
        %v1006 = vand.u32 %v1005, 4294901760
        %1007 = vmatpush1.msra.mxu0 %v1006
        %v1008 = vand.u32 %v840, 4294901760
        %v1009 = vsub.f32 %v840, %v1008
        %v1010 = vand.u32 %v1009, 4294901760
        %v1011 = vsub.f32 %v1009, %v1010
        %v1012 = vand.u32 %v1011, 4294901760
        %1013 = vmatprep.subr.mxu0 %v1012
        %v1014 = vand.u32 %v839, 4294901760
        %v1015 = vsub.f32 %v839, %v1014
        %v1016 = vand.u32 %v1015, 4294901760
        %v1017 = vsub.f32 %v1015, %v1016
        %v1018 = vand.u32 %v1017, 4294901760
        %1019 = vmatpush1.msra.mxu0 %v1018
        %1020 = vmatprep.subr.mxu0 0.0
        %1021 = vmatpush2.msra.mxu0 0.0
        %1022 = vmatprep.subr.mxu0 0.0
        %1023 = vmatpush2.msra.mxu0 0.0
        %1024 = vmatprep.subr.mxu0 0.0
        %1025 = vmatpush2.msra.mxu0 0.0
        %1026 = vmatprep.subr.mxu0 0.0
        %1027 = vmatpush2.msra.mxu0 0.0
        %1028 = vmatprep.subr.mxu0 0.0
        %1029 = vmatpush2.msra.mxu0 0.0
        %1030 = vmatprep.subr.mxu0 0.0
        %1031 = vmatpush2.msra.mxu0 0.0
        %1032 = vmatprep.subr.mxu0 0.0
        %1033 = vmatpush2.msra.mxu0 0.0
        %1034 = vmatprep.subr.mxu0 0.0
        %1035 = vmatpush2.msra.mxu0 0.0
        %1036 = vmatprep.subr.mxu0 0.0
        %1037 = vmatpush2.msra.mxu0 0.0
        %1038 = vmatprep.subr.mxu0 0.0
        %1039 = vmatpush2.msra.mxu0 0.0
        %1040 = vmatprep.subr.mxu0 0.0
        %1041 = vmatpush2.msra.mxu0 0.0
        %1042 = vmatprep.subr.mxu0 0.0
        %1043 = vmatpush2.msra.mxu0 0.0
        %1044 = vmatprep.subr.mxu0 0.0
        %1045 = vmatpush2.msra.mxu0 0.0
        %1046 = vmatprep.subr.mxu0 0.0
        %1047 = vmatpush2.msra.mxu0 0.0
        %1048 = vmatprep.subr.mxu0 0.0
        %1049 = vmatpush2.msra.mxu0 0.0
        %1050 = vmatprep.subr.mxu0 0.0
        %1051 = vmatpush2.msra.mxu0 0.0
        %1052 = vmatprep.mubr.f32.mxu0 0.0
        %v1053 = vand.u32 %v844, 4294901760
        %1054 = vmatmul.mubr.f32.gmra.mxu0 %v1053
        %v1055 = vpop.f32.mrf.mxu0
        %v1056 = vadd.f32 %v931, %v1055
        %v1057 = vpop.f32.mrf.mxu0
        %v1058 = vadd.f32 %v933, %v1057
        %1059 = vmatprep.mubr.f32.mxu0 0.0
        %v1060 = vand.u32 %v847, 4294901760
        %1061 = vmatmul.mubr.f32.gmra.mxu0 %v1060
        %v1062 = vpop.f32.mrf.mxu0
        %v1063 = vadd.f32 %v942, %v1062
        %v1064 = vpop.f32.mrf.mxu0
        %v1065 = vadd.f32 %v944, %v1064
        %1066 = vmatprep.mubr.f32.mxu0 0.0
        %v1067 = vand.u32 %v850, 4294901760
        %1068 = vmatmul.mubr.f32.gmra.mxu0 %v1067
        %v1069 = vpop.f32.mrf.mxu0
        %v1070 = vadd.f32 %v953, %v1069
        %v1071 = vpop.f32.mrf.mxu0
        %v1072 = vadd.f32 %v955, %v1071
        %1073 = vmatprep.mubr.f32.mxu0 0.0
        %v1074 = vand.u32 %v853, 4294901760
        %1075 = vmatmul.mubr.f32.gmra.mxu0 %v1074
        %v1076 = vpop.f32.mrf.mxu0
        %v1077 = vadd.f32 %v964, %v1076
        %v1078 = vpop.f32.mrf.mxu0
        %v1079 = vadd.f32 %v966, %v1078
        %1080 = vdwg.mxu0
        %1081 = vmatprep.subr.mxu0 0.0
        %1082 = vmatpush1.msra.mxu0 0.0
        %1083 = vmatprep.subr.mxu0 0.0
        %1084 = vmatpush1.msra.mxu0 0.0
        %1085 = vmatprep.subr.mxu0 0.0
        %1086 = vmatpush1.msra.mxu0 0.0
        %1087 = vmatprep.subr.mxu0 0.0
        %1088 = vmatpush1.msra.mxu0 0.0
        %1089 = vmatprep.subr.mxu0 0.0
        %1090 = vmatpush1.msra.mxu0 0.0
        %1091 = vmatprep.subr.mxu0 0.0
        %1092 = vmatpush1.msra.mxu0 0.0
        %1093 = vmatprep.subr.mxu0 0.0
        %1094 = vmatpush1.msra.mxu0 0.0
        %1095 = vmatprep.subr.mxu0 0.0
        %1096 = vmatpush1.msra.mxu0 0.0
        %1097 = vmatprep.subr.mxu0 0.0
        %1098 = vmatpush1.msra.mxu0 0.0
        %1099 = vmatprep.subr.mxu0 0.0
        %1100 = vmatpush1.msra.mxu0 0.0
        %1101 = vmatprep.subr.mxu0 0.0
        %1102 = vmatpush1.msra.mxu0 0.0
        %1103 = vmatprep.subr.mxu0 0.0
        %1104 = vmatpush1.msra.mxu0 0.0
        %1105 = vmatprep.subr.mxu0 0.0
        %1106 = vmatpush1.msra.mxu0 0.0
        %1107 = vmatprep.subr.mxu0 0.0
        %1108 = vmatpush1.msra.mxu0 0.0
        %v1109 = vand.u32 %v842, 4294901760
        %v1110 = vsub.f32 %v842, %v1109
        %1111 = vmatprep.subr.mxu0 %v1110
        %v1112 = vand.u32 %v841, 4294901760
        %v1113 = vsub.f32 %v841, %v1112
        %1114 = vmatpush1.msra.mxu0 %v1113
        %v1115 = vand.u32 %v840, 4294901760
        %v1116 = vsub.f32 %v840, %v1115
        %1117 = vmatprep.subr.mxu0 %v1116
        %v1118 = vand.u32 %v839, 4294901760
        %v1119 = vsub.f32 %v839, %v1118
        %1120 = vmatpush1.msra.mxu0 %v1119
        %1121 = vmatprep.subr.mxu0 0.0
        %1122 = vmatpush2.msra.mxu0 0.0
        %1123 = vmatprep.subr.mxu0 0.0
        %1124 = vmatpush2.msra.mxu0 0.0
        %1125 = vmatprep.subr.mxu0 0.0
        %1126 = vmatpush2.msra.mxu0 0.0
        %1127 = vmatprep.subr.mxu0 0.0
        %1128 = vmatpush2.msra.mxu0 0.0
        %1129 = vmatprep.subr.mxu0 0.0
        %1130 = vmatpush2.msra.mxu0 0.0
        %1131 = vmatprep.subr.mxu0 0.0
        %1132 = vmatpush2.msra.mxu0 0.0
        %1133 = vmatprep.subr.mxu0 0.0
        %1134 = vmatpush2.msra.mxu0 0.0
        %1135 = vmatprep.subr.mxu0 0.0
        %1136 = vmatpush2.msra.mxu0 0.0
        %1137 = vmatprep.subr.mxu0 0.0
        %1138 = vmatpush2.msra.mxu0 0.0
        %1139 = vmatprep.subr.mxu0 0.0
        %1140 = vmatpush2.msra.mxu0 0.0
        %1141 = vmatprep.subr.mxu0 0.0
        %1142 = vmatpush2.msra.mxu0 0.0
        %1143 = vmatprep.subr.mxu0 0.0
        %1144 = vmatpush2.msra.mxu0 0.0
        %1145 = vmatprep.subr.mxu0 0.0
        %1146 = vmatpush2.msra.mxu0 0.0
        %1147 = vmatprep.subr.mxu0 0.0
        %1148 = vmatpush2.msra.mxu0 0.0
        %1149 = vmatprep.subr.mxu0 0.0
        %1150 = vmatpush2.msra.mxu0 0.0
        %1151 = vmatprep.subr.mxu0 0.0
        %1152 = vmatpush2.msra.mxu0 0.0
        %1153 = vmatprep.mubr.f32.mxu0 0.0
        %v1154 = vand.u32 %v844, 4294901760
        %v1155 = vsub.f32 %v844, %v1154
        %1156 = vmatmul.mubr.f32.gmra.mxu0 %v1155
        %v1157 = vpop.f32.mrf.mxu0
        %v1158 = vadd.f32 %v1056, %v1157
        %v1159 = vpop.f32.mrf.mxu0
        %v1160 = vadd.f32 %v1058, %v1159
        %1161 = vmatprep.mubr.f32.mxu0 0.0
        %v1162 = vand.u32 %v847, 4294901760
        %v1163 = vsub.f32 %v847, %v1162
        %1164 = vmatmul.mubr.f32.gmra.mxu0 %v1163
        %v1165 = vpop.f32.mrf.mxu0
        %v1166 = vadd.f32 %v1063, %v1165
        %v1167 = vpop.f32.mrf.mxu0
        %v1168 = vadd.f32 %v1065, %v1167
        %1169 = vmatprep.mubr.f32.mxu0 0.0
        %v1170 = vand.u32 %v850, 4294901760
        %v1171 = vsub.f32 %v850, %v1170
        %1172 = vmatmul.mubr.f32.gmra.mxu0 %v1171
        %v1173 = vpop.f32.mrf.mxu0
        %v1174 = vadd.f32 %v1070, %v1173
        %v1175 = vpop.f32.mrf.mxu0
        %v1176 = vadd.f32 %v1072, %v1175
        %1177 = vmatprep.mubr.f32.mxu0 0.0
        %v1178 = vand.u32 %v853, 4294901760
        %v1179 = vsub.f32 %v853, %v1178
        %1180 = vmatmul.mubr.f32.gmra.mxu0 %v1179
        %v1181 = vpop.f32.mrf.mxu0
        %v1182 = vadd.f32 %v1077, %v1181
        %v1183 = vpop.f32.mrf.mxu0
        %v1184 = vadd.f32 %v1079, %v1183
        %1185 = vdwg.mxu0
        %1186 = vmatprep.subr.mxu0 0.0
        %1187 = vmatpush1.msra.mxu0 0.0
        %1188 = vmatprep.subr.mxu0 0.0
        %1189 = vmatpush1.msra.mxu0 0.0
        %1190 = vmatprep.subr.mxu0 0.0
        %1191 = vmatpush1.msra.mxu0 0.0
        %1192 = vmatprep.subr.mxu0 0.0
        %1193 = vmatpush1.msra.mxu0 0.0
        %1194 = vmatprep.subr.mxu0 0.0
        %1195 = vmatpush1.msra.mxu0 0.0
        %1196 = vmatprep.subr.mxu0 0.0
        %1197 = vmatpush1.msra.mxu0 0.0
        %1198 = vmatprep.subr.mxu0 0.0
        %1199 = vmatpush1.msra.mxu0 0.0
        %1200 = vmatprep.subr.mxu0 0.0
        %1201 = vmatpush1.msra.mxu0 0.0
        %1202 = vmatprep.subr.mxu0 0.0
        %1203 = vmatpush1.msra.mxu0 0.0
        %1204 = vmatprep.subr.mxu0 0.0
        %1205 = vmatpush1.msra.mxu0 0.0
        %1206 = vmatprep.subr.mxu0 0.0
        %1207 = vmatpush1.msra.mxu0 0.0
        %1208 = vmatprep.subr.mxu0 0.0
        %1209 = vmatpush1.msra.mxu0 0.0
        %1210 = vmatprep.subr.mxu0 0.0
        %1211 = vmatpush1.msra.mxu0 0.0
        %1212 = vmatprep.subr.mxu0 0.0
        %1213 = vmatpush1.msra.mxu0 0.0
        %v1214 = vand.u32 %v842, 4294901760
        %1215 = vmatprep.subr.mxu0 %v1214
        %v1216 = vand.u32 %v841, 4294901760
        %1217 = vmatpush1.msra.mxu0 %v1216
        %v1218 = vand.u32 %v840, 4294901760
        %1219 = vmatprep.subr.mxu0 %v1218
        %v1220 = vand.u32 %v839, 4294901760
        %1221 = vmatpush1.msra.mxu0 %v1220
        %1222 = vmatprep.subr.mxu0 0.0
        %1223 = vmatpush2.msra.mxu0 0.0
        %1224 = vmatprep.subr.mxu0 0.0
        %1225 = vmatpush2.msra.mxu0 0.0
        %1226 = vmatprep.subr.mxu0 0.0
        %1227 = vmatpush2.msra.mxu0 0.0
        %1228 = vmatprep.subr.mxu0 0.0
        %1229 = vmatpush2.msra.mxu0 0.0
        %1230 = vmatprep.subr.mxu0 0.0
        %1231 = vmatpush2.msra.mxu0 0.0
        %1232 = vmatprep.subr.mxu0 0.0
        %1233 = vmatpush2.msra.mxu0 0.0
        %1234 = vmatprep.subr.mxu0 0.0
        %1235 = vmatpush2.msra.mxu0 0.0
        %1236 = vmatprep.subr.mxu0 0.0
        %1237 = vmatpush2.msra.mxu0 0.0
        %1238 = vmatprep.subr.mxu0 0.0
        %1239 = vmatpush2.msra.mxu0 0.0
        %1240 = vmatprep.subr.mxu0 0.0
        %1241 = vmatpush2.msra.mxu0 0.0
        %1242 = vmatprep.subr.mxu0 0.0
        %1243 = vmatpush2.msra.mxu0 0.0
        %1244 = vmatprep.subr.mxu0 0.0
        %1245 = vmatpush2.msra.mxu0 0.0
        %1246 = vmatprep.subr.mxu0 0.0
        %1247 = vmatpush2.msra.mxu0 0.0
        %1248 = vmatprep.subr.mxu0 0.0
        %1249 = vmatpush2.msra.mxu0 0.0
        %1250 = vmatprep.subr.mxu0 0.0
        %1251 = vmatpush2.msra.mxu0 0.0
        %1252 = vmatprep.subr.mxu0 0.0
        %1253 = vmatpush2.msra.mxu0 0.0
        %1254 = vmatprep.mubr.f32.mxu0 0.0
        %v1255 = vand.u32 %v844, 4294901760
        %v1256 = vsub.f32 %v844, %v1255
        %v1257 = vand.u32 %v1256, 4294901760
        %1258 = vmatmul.mubr.f32.gmra.mxu0 %v1257
        %v1259 = vpop.f32.mrf.mxu0
        %v1260 = vadd.f32 %v1158, %v1259
        %v1261 = vpop.f32.mrf.mxu0
        %v1262 = vadd.f32 %v1160, %v1261
        %1263 = vmatprep.mubr.f32.mxu0 0.0
        %v1264 = vand.u32 %v847, 4294901760
        %v1265 = vsub.f32 %v847, %v1264
        %v1266 = vand.u32 %v1265, 4294901760
        %1267 = vmatmul.mubr.f32.gmra.mxu0 %v1266
        %v1268 = vpop.f32.mrf.mxu0
        %v1269 = vadd.f32 %v1166, %v1268
        %v1270 = vpop.f32.mrf.mxu0
        %v1271 = vadd.f32 %v1168, %v1270
        %1272 = vmatprep.mubr.f32.mxu0 0.0
        %v1273 = vand.u32 %v850, 4294901760
        %v1274 = vsub.f32 %v850, %v1273
        %v1275 = vand.u32 %v1274, 4294901760
        %1276 = vmatmul.mubr.f32.gmra.mxu0 %v1275
        %v1277 = vpop.f32.mrf.mxu0
        %v1278 = vadd.f32 %v1174, %v1277
        %v1279 = vpop.f32.mrf.mxu0
        %v1280 = vadd.f32 %v1176, %v1279
        %1281 = vmatprep.mubr.f32.mxu0 0.0
        %v1282 = vand.u32 %v853, 4294901760
        %v1283 = vsub.f32 %v853, %v1282
        %v1284 = vand.u32 %v1283, 4294901760
        %1285 = vmatmul.mubr.f32.gmra.mxu0 %v1284
        %v1286 = vpop.f32.mrf.mxu0
        %v1287 = vadd.f32 %v1182, %v1286
        %v1288 = vpop.f32.mrf.mxu0
        %v1289 = vadd.f32 %v1184, %v1288
        %1290 = vdwg.mxu0
        %1291 = vmatprep.subr.mxu0 0.0
        %1292 = vmatpush1.msra.mxu0 0.0
        %1293 = vmatprep.subr.mxu0 0.0
        %1294 = vmatpush1.msra.mxu0 0.0
        %1295 = vmatprep.subr.mxu0 0.0
        %1296 = vmatpush1.msra.mxu0 0.0
        %1297 = vmatprep.subr.mxu0 0.0
        %1298 = vmatpush1.msra.mxu0 0.0
        %1299 = vmatprep.subr.mxu0 0.0
        %1300 = vmatpush1.msra.mxu0 0.0
        %1301 = vmatprep.subr.mxu0 0.0
        %1302 = vmatpush1.msra.mxu0 0.0
        %1303 = vmatprep.subr.mxu0 0.0
        %1304 = vmatpush1.msra.mxu0 0.0
        %1305 = vmatprep.subr.mxu0 0.0
        %1306 = vmatpush1.msra.mxu0 0.0
        %1307 = vmatprep.subr.mxu0 0.0
        %1308 = vmatpush1.msra.mxu0 0.0
        %1309 = vmatprep.subr.mxu0 0.0
        %1310 = vmatpush1.msra.mxu0 0.0
        %1311 = vmatprep.subr.mxu0 0.0
        %1312 = vmatpush1.msra.mxu0 0.0
        %1313 = vmatprep.subr.mxu0 0.0
        %1314 = vmatpush1.msra.mxu0 0.0
        %1315 = vmatprep.subr.mxu0 0.0
        %1316 = vmatpush1.msra.mxu0 0.0
        %1317 = vmatprep.subr.mxu0 0.0
        %1318 = vmatpush1.msra.mxu0 0.0
        %v1319 = vand.u32 %v842, 4294901760
        %v1320 = vsub.f32 %v842, %v1319
        %v1321 = vand.u32 %v1320, 4294901760
        %1322 = vmatprep.subr.mxu0 %v1321
        %v1323 = vand.u32 %v841, 4294901760
        %v1324 = vsub.f32 %v841, %v1323
        %v1325 = vand.u32 %v1324, 4294901760
        %1326 = vmatpush1.msra.mxu0 %v1325
        %v1327 = vand.u32 %v840, 4294901760
        %v1328 = vsub.f32 %v840, %v1327
        %v1329 = vand.u32 %v1328, 4294901760
        %1330 = vmatprep.subr.mxu0 %v1329
        %v1331 = vand.u32 %v839, 4294901760
        %v1332 = vsub.f32 %v839, %v1331
        %v1333 = vand.u32 %v1332, 4294901760
        %1334 = vmatpush1.msra.mxu0 %v1333
        %1335 = vmatprep.subr.mxu0 0.0
        %1336 = vmatpush2.msra.mxu0 0.0
        %1337 = vmatprep.subr.mxu0 0.0
        %1338 = vmatpush2.msra.mxu0 0.0
        %1339 = vmatprep.subr.mxu0 0.0
        %1340 = vmatpush2.msra.mxu0 0.0
        %1341 = vmatprep.subr.mxu0 0.0
        %1342 = vmatpush2.msra.mxu0 0.0
        %1343 = vmatprep.subr.mxu0 0.0
        %1344 = vmatpush2.msra.mxu0 0.0
        %1345 = vmatprep.subr.mxu0 0.0
        %1346 = vmatpush2.msra.mxu0 0.0
        %1347 = vmatprep.subr.mxu0 0.0
        %1348 = vmatpush2.msra.mxu0 0.0
        %1349 = vmatprep.subr.mxu0 0.0
        %1350 = vmatpush2.msra.mxu0 0.0
        %1351 = vmatprep.subr.mxu0 0.0
        %1352 = vmatpush2.msra.mxu0 0.0
        %1353 = vmatprep.subr.mxu0 0.0
        %1354 = vmatpush2.msra.mxu0 0.0
        %1355 = vmatprep.subr.mxu0 0.0
        %1356 = vmatpush2.msra.mxu0 0.0
        %1357 = vmatprep.subr.mxu0 0.0
        %1358 = vmatpush2.msra.mxu0 0.0
        %1359 = vmatprep.subr.mxu0 0.0
        %1360 = vmatpush2.msra.mxu0 0.0
        %1361 = vmatprep.subr.mxu0 0.0
        %1362 = vmatpush2.msra.mxu0 0.0
        %1363 = vmatprep.subr.mxu0 0.0
        %1364 = vmatpush2.msra.mxu0 0.0
        %1365 = vmatprep.subr.mxu0 0.0
        %1366 = vmatpush2.msra.mxu0 0.0
        %1367 = vmatprep.mubr.f32.mxu0 0.0
        %v1368 = vand.u32 %v844, 4294901760
        %1369 = vmatmul.mubr.f32.gmra.mxu0 %v1368
        %v1370 = vpop.f32.mrf.mxu0
        %v1371 = vadd.f32 %v1260, %v1370
        %v1372 = vpop.f32.mrf.mxu0
        %v1373 = vadd.f32 %v1262, %v1372
        %1374 = vmatprep.mubr.f32.mxu0 0.0
        %v1375 = vand.u32 %v847, 4294901760
        %1376 = vmatmul.mubr.f32.gmra.mxu0 %v1375
        %v1377 = vpop.f32.mrf.mxu0
        %v1378 = vadd.f32 %v1269, %v1377
        %v1379 = vpop.f32.mrf.mxu0
        %v1380 = vadd.f32 %v1271, %v1379
        %1381 = vmatprep.mubr.f32.mxu0 0.0
        %v1382 = vand.u32 %v850, 4294901760
        %1383 = vmatmul.mubr.f32.gmra.mxu0 %v1382
        %v1384 = vpop.f32.mrf.mxu0
        %v1385 = vadd.f32 %v1278, %v1384
        %v1386 = vpop.f32.mrf.mxu0
        %v1387 = vadd.f32 %v1280, %v1386
        %1388 = vmatprep.mubr.f32.mxu0 0.0
        %v1389 = vand.u32 %v853, 4294901760
        %1390 = vmatmul.mubr.f32.gmra.mxu0 %v1389
        %v1391 = vpop.f32.mrf.mxu0
        %v1392 = vadd.f32 %v1287, %v1391
        %v1393 = vpop.f32.mrf.mxu0
        %v1394 = vadd.f32 %v1289, %v1393
        %1395 = vdwg.mxu0
        %1396 = vmatprep.subr.mxu0 0.0
        %1397 = vmatpush1.msra.mxu0 0.0
        %1398 = vmatprep.subr.mxu0 0.0
        %1399 = vmatpush1.msra.mxu0 0.0
        %1400 = vmatprep.subr.mxu0 0.0
        %1401 = vmatpush1.msra.mxu0 0.0
        %1402 = vmatprep.subr.mxu0 0.0
        %1403 = vmatpush1.msra.mxu0 0.0
        %1404 = vmatprep.subr.mxu0 0.0
        %1405 = vmatpush1.msra.mxu0 0.0
        %1406 = vmatprep.subr.mxu0 0.0
        %1407 = vmatpush1.msra.mxu0 0.0
        %1408 = vmatprep.subr.mxu0 0.0
        %1409 = vmatpush1.msra.mxu0 0.0
        %1410 = vmatprep.subr.mxu0 0.0
        %1411 = vmatpush1.msra.mxu0 0.0
        %1412 = vmatprep.subr.mxu0 0.0
        %1413 = vmatpush1.msra.mxu0 0.0
        %1414 = vmatprep.subr.mxu0 0.0
        %1415 = vmatpush1.msra.mxu0 0.0
        %1416 = vmatprep.subr.mxu0 0.0
        %1417 = vmatpush1.msra.mxu0 0.0
        %1418 = vmatprep.subr.mxu0 0.0
        %1419 = vmatpush1.msra.mxu0 0.0
        %1420 = vmatprep.subr.mxu0 0.0
        %1421 = vmatpush1.msra.mxu0 0.0
        %1422 = vmatprep.subr.mxu0 0.0
        %1423 = vmatpush1.msra.mxu0 0.0
        %v1424 = vand.u32 %v842, 4294901760
        %1425 = vmatprep.subr.mxu0 %v1424
        %v1426 = vand.u32 %v841, 4294901760
        %1427 = vmatpush1.msra.mxu0 %v1426
        %v1428 = vand.u32 %v840, 4294901760
        %1429 = vmatprep.subr.mxu0 %v1428
        %v1430 = vand.u32 %v839, 4294901760
        %1431 = vmatpush1.msra.mxu0 %v1430
        %1432 = vmatprep.subr.mxu0 0.0
        %1433 = vmatpush2.msra.mxu0 0.0
        %1434 = vmatprep.subr.mxu0 0.0
        %1435 = vmatpush2.msra.mxu0 0.0
        %1436 = vmatprep.subr.mxu0 0.0
        %1437 = vmatpush2.msra.mxu0 0.0
        %1438 = vmatprep.subr.mxu0 0.0
        %1439 = vmatpush2.msra.mxu0 0.0
        %1440 = vmatprep.subr.mxu0 0.0
        %1441 = vmatpush2.msra.mxu0 0.0
        %1442 = vmatprep.subr.mxu0 0.0
        %1443 = vmatpush2.msra.mxu0 0.0
        %1444 = vmatprep.subr.mxu0 0.0
        %1445 = vmatpush2.msra.mxu0 0.0
        %1446 = vmatprep.subr.mxu0 0.0
        %1447 = vmatpush2.msra.mxu0 0.0
        %1448 = vmatprep.subr.mxu0 0.0
        %1449 = vmatpush2.msra.mxu0 0.0
        %1450 = vmatprep.subr.mxu0 0.0
        %1451 = vmatpush2.msra.mxu0 0.0
        %1452 = vmatprep.subr.mxu0 0.0
        %1453 = vmatpush2.msra.mxu0 0.0
        %1454 = vmatprep.subr.mxu0 0.0
        %1455 = vmatpush2.msra.mxu0 0.0
        %1456 = vmatprep.subr.mxu0 0.0
        %1457 = vmatpush2.msra.mxu0 0.0
        %1458 = vmatprep.subr.mxu0 0.0
        %1459 = vmatpush2.msra.mxu0 0.0
        %1460 = vmatprep.subr.mxu0 0.0
        %1461 = vmatpush2.msra.mxu0 0.0
        %1462 = vmatprep.subr.mxu0 0.0
        %1463 = vmatpush2.msra.mxu0 0.0
        %1464 = vmatprep.mubr.f32.mxu0 0.0
        %v1465 = vand.u32 %v844, 4294901760
        %1466 = vmatmul.mubr.f32.gmra.mxu0 %v1465
        %v1467 = vpop.f32.mrf.mxu0
        %v1468 = vadd.f32 %v1371, %v1467
        %v1469 = vpop.f32.mrf.mxu0
        %v1470 = vadd.f32 %v1373, %v1469
        %1471 = vmatprep.mubr.f32.mxu0 0.0
        %v1472 = vand.u32 %v847, 4294901760
        %1473 = vmatmul.mubr.f32.gmra.mxu0 %v1472
        %v1474 = vpop.f32.mrf.mxu0
        %v1475 = vadd.f32 %v1378, %v1474
        %v1476 = vpop.f32.mrf.mxu0
        %v1477 = vadd.f32 %v1380, %v1476
        %1478 = vmatprep.mubr.f32.mxu0 0.0
        %v1479 = vand.u32 %v850, 4294901760
        %1480 = vmatmul.mubr.f32.gmra.mxu0 %v1479
        %v1481 = vpop.f32.mrf.mxu0
        %v1482 = vadd.f32 %v1385, %v1481
        %v1483 = vpop.f32.mrf.mxu0
        %v1484 = vadd.f32 %v1387, %v1483
        %1485 = vmatprep.mubr.f32.mxu0 0.0
        %v1486 = vand.u32 %v853, 4294901760
        %1487 = vmatmul.mubr.f32.gmra.mxu0 %v1486
        %v1488 = vpop.f32.mrf.mxu0
        %v1489 = vadd.f32 %v1392, %v1488
        %v1490 = vpop.f32.mrf.mxu0
        %v1491 = vadd.f32 %v1394, %v1490
        %1492 = vdwg.mxu0
        %1493 = vst [vmem:[%s175] sm:$0xff] %v810
        %1494 = vst [vmem:[%s175 + $0x8] sm:$0xff] %v812
        %1495 = vst [vmem:[%s175 + $0x10] sm:$0xff] %v817
        %1496 = vst [vmem:[%s175 + $0x18] sm:$0xff] %v819
        %1497 = vst [vmem:[%s175 + $0x20] sm:$0xff] %v824
        %1498 = vst [vmem:[%s175 + $0x28] sm:$0xff] %v826
        %1499 = vst [vmem:[%s175 + $0x30] sm:$0xff] %v831
        %1500 = vst [vmem:[%s175 + $0x38] sm:$0xff] %v833
        %1501 = vst [vmem:[%s175 + $0x40] sm:$0xff] %v1468
        %1502 = vst [vmem:[%s175 + $0x48] sm:$0xff] %v1470
        %1503 = vst [vmem:[%s175 + $0x50] sm:$0xff] %v1475
        %1504 = vst [vmem:[%s175 + $0x58] sm:$0xff] %v1477
        %1505 = vst [vmem:[%s175 + $0x60] sm:$0xff] %v1482
        %1506 = vst [vmem:[%s175 + $0x68] sm:$0xff] %v1484
        %1507 = vst [vmem:[%s175 + $0x70] sm:$0xff] %v1489
        %1508 = vst [vmem:[%s175 + $0x78] sm:$0xff] %v1491
        %s1509 = sand.u32 %s110, 1
        %s1510 = scalar_lea.sflag [#allocation3], %s1509
        %s1511 = sand.u32 %s110, 1
        %s1512 = smul.addr %s1511, 128
        %s1513 = scalar_lea.vmem [#allocation2], %s1512
        // Predicated region
        $region37: #{tpu_custom_call.1} parent=35 // pred_check
          %p1514 = pneg %p120
        $region38: #{tpu_custom_call.1} parent=35 // pred_check_branch
          %1516 = sbr.rel (%p1514) target = $region40
        $region39: #{tpu_custom_call.1} parent=35 // pred_region
          %s1518 = ssub.s32 2048, 2048
          %1519 = vsyncadd %s1510, %s1518
          %s1520 = smul.addr %s18, 16
          %s1521 = smul.addr %s1520, 128
          %s1522 = scalar_lea.hbm %s4, %s1521
          %s1523 = sshll.u32 %s1513, 4
          %s1524 = int_to_ptr.vmem [resolvable:$true] %s1523
          %1529 = dma.vmem_to_hbm [thread:$0]  %s1524, 2048, %s1522, %s1510, 256, 256, 16
        $region40: #{tpu_custom_call.1} parent=35 // pred_fallthru
          _
      $region36: #{tpu_custom_call.1} parent=5 // pred_fallthru
        _
      %p1530 = scmp.le.s32.totalorder 2, %s13
      // Predicated region
      $region41: #{tpu_custom_call.1} parent=5 // pred_check
        %p1531 = pneg %p1530
      $region42: #{tpu_custom_call.1} parent=5 // pred_check_branch
        %1533 = sbr.rel (%p1531) target = $region44
      $region43: #{tpu_custom_call.1} parent=5 // pred_region
        %s1534 = ssub.s32 %s13, 2
        // Predicated region
        $region45: #{tpu_custom_call.1} parent=43 // pred_check
          %p1535 = pneg %p126
        $region46: #{tpu_custom_call.1} parent=43 // pred_check_branch
          %1537 = sbr.rel (%p1535) target = $region48
        $region47: #{tpu_custom_call.1} parent=43 // pred_region
          %s1538 = sand.u32 %s111, 1
          %s1539 = scalar_lea.sflag [#allocation3], %s1538
          %s1540 = sand.u32 %s111, 1
          %s1541 = smul.addr %s1540, 128
          %s1542 = scalar_lea.vmem [#allocation2], %s1541
          %1543 = dma.done %s1539, 2048
        $region48: #{tpu_custom_call.1} parent=43 // pred_fallthru
          _
      $region44: #{tpu_custom_call.1} parent=5 // pred_fallthru
        _
    $region6: #{tpu_custom_call.1} parent=1 // loop_footer
      %s17 = sadd.s32 1, %s13
    $region7: #{tpu_custom_call.1} parent=1 // loop_footer_branch
      %12 = sbr.rel target = $region3
    $region8: #{tpu_custom_call.1} parent=1 // loop_exit
      _
    %1544 = vsyncpa [#allocation3], 1
    %s1545 = scalar_lea.sflag [#allocation3], 1
    %1546 = vsyncpa %s1545, 1

</llo_original>
